<compile_context>
chip_gen: v7x
topology: tpu7x:2x2x1
jax: 0.10.0
libtpu: 0.0.40
codegen_flags: <defaults>
</compile_context>

<pallas_src>
import math
from functools import partial

import jax
import jax.numpy as jnp
from jax.experimental import pallas as pl
from jax.experimental.pallas import tpu as pltpu


# ----------------------------------------------------------------------------------
# Tile-size helpers
# ----------------------------------------------------------------------------------
def _pick_m_tile(M, cap=512):
    """Largest multiple-of-8 divisor of M up to cap, else the full M (single block)."""
    t = min(cap, (M // 8) * 8)
    while t >= 8:
        if M % t == 0:
            return t
        t -= 8
    return M


def _pick_conv_rows(Ho, Wo, Wp, C, halo, cout):
    """Row-tile height for the fused conv kernel: the largest divisor of Ho that keeps
    the double-buffered input band and the f32 accumulator around ~2 MB each, so the
    kernel stays inside the default scoped-VMEM budget on every TPU generation."""
    budget = 2 * 1024 * 1024
    row_in = max(1, Wp * C * 2)                    # bf16 band row
    row_big = max(1, Wo * max(cout, C) * 4)        # f32 acc / per-tap operand row
    cap = min(budget // row_in - halo, budget // row_big, 64, Ho)
    cap = max(int(cap), 1)
    for t in range(cap, 0, -1):
        if Ho % t == 0:
            return t
    return 1


def _pick_corr_rows(H, W, C, md):
    row = max(1, (W + 2 * md) * C * 2)
    cap = min((2 * 1024 * 1024) // row - 2 * md, 16, H)
    cap = max(int(cap), 1)
    for t in range(cap, 0, -1):
        if H % t == 0:
            return t
    return 1


# ----------------------------------------------------------------------------------
# Pallas kernel 1: fused stride-1 conv (no im2col).
#   Input is spatially pre-padded NHWC bf16 in HBM; the kernel DMAs an overlapping
#   row band per output row tile (manual double buffering), accumulates the KH*KW tap
#   matmuls in an f32 VMEM scratch and writes bias + LeakyReLU fused output.
# ----------------------------------------------------------------------------------
def _conv_kernel(x_hbm, w_ref, b_ref, o_ref, xbuf, sem, acc_ref,
                 *, KH, KW, dil, tr, Wo, cout, row_off, col_off, slope, R):
    n = pl.program_id(0)
    r = pl.program_id(1)
    step = n * R + r
    nsteps = pl.num_programs(0) * R
    band = tr + (KH - 1) * dil
    C = w_ref.shape[1]

    def fetch(s, slot):
        nn = s // R
        rr = s - nn * R
        pltpu.make_async_copy(
            x_hbm.at[nn, pl.ds(rr * tr + row_off, band)],
            xbuf.at[slot], sem.at[slot]).start()

    @pl.when(step == 0)
    def _():
        fetch(step, 0)

    @pl.when(step + 1 < nsteps)          # prefetch next row band while computing
    def _():
        fetch(step + 1, (step + 1) % 2)

    slot = step % 2
    pltpu.make_async_copy(x_hbm.at[0, pl.ds(0, band)], xbuf.at[slot], sem.at[slot]).wait()

    # Tap-by-tap shifted matmul accumulation (review item #1: no im2col in HBM).
    for t in range(KH * KW):
        ky, kx = t // KW, t % KW
        a = xbuf[slot, pl.ds(ky * dil, tr), pl.ds(col_off + kx * dil, Wo), :]
        a = a.reshape(tr * Wo, C)
        part = jnp.dot(a, w_ref[t], preferred_element_type=jnp.float32)
        if t == 0:
            acc_ref[...] = part
        else:
            acc_ref[...] += part

    res = acc_ref[...] + b_ref[...]
    if slope is not None:
        res = jnp.where(res >= 0.0, res, slope * res)
    o_ref[...] = res.reshape(tr, Wo, cout).astype(o_ref.dtype)


def _conv_rows(xpad, w, b, *, Ho, Wo, KH, KW, dil, row_off, col_off, slope, out_dtype):
    """Run the fused conv kernel over row tiles.  xpad: (N, Hp, Wp, C) bf16, spatially
    pre-padded.  w: (KH*KW, C, Cout) bf16.  b: (1, Cout) f32."""
    N, Hp, Wp, C = xpad.shape
    cout = w.shape[-1]
    halo = (KH - 1) * dil
    tr = _pick_conv_rows(Ho, Wo, Wp, C, halo, cout)
    R = Ho // tr
    band = tr + halo

    kern = partial(_conv_kernel, KH=KH, KW=KW, dil=dil, tr=tr, Wo=Wo, cout=cout,
                   row_off=row_off, col_off=col_off, slope=slope, R=R)
    return pl.pallas_call(
        kern,
        out_shape=jax.ShapeDtypeStruct((N, Ho, Wo, cout), out_dtype),
        grid_spec=pltpu.PrefetchScalarGridSpec(
            num_scalar_prefetch=0,
            grid=(N, R),
            in_specs=[
                pl.BlockSpec(memory_space=pl.ANY),                        # padded act (HBM)
                pl.BlockSpec((KH * KW, C, cout), lambda n, r: (0, 0, 0)),  # weights resident
                pl.BlockSpec((1, cout), lambda n, r: (0, 0)),              # bias resident
            ],
            out_specs=pl.BlockSpec((None, tr, Wo, cout), lambda n, r: (n, r, 0, 0)),
            scratch_shapes=[
                pltpu.VMEM((2, band, Wp, C), jnp.bfloat16),   # double-buffered input band
                pltpu.SemaphoreType.DMA((2,)),
                pltpu.VMEM((tr * Wo, cout), jnp.float32),     # f32 accumulator
            ],
        ),
        compiler_params=pltpu.CompilerParams(
            # Sequential grid order is required for the cross-step input prefetch chain.
            dimension_semantics=("arbitrary", "arbitrary"),
        ),
    )(xpad, w, b)


def conv2d_fused(x, cp, dilation=1, negative_slope=0.1, out_dtype=jnp.bfloat16):
    """Stride-1 'same' conv (3x3 or dilated 3x3) via the fused Pallas kernel."""
    N, H, W, C = x.shape
    d = dilation
    pad = d * (cp["kh"] - 1) // 2
    xpad = jnp.pad(x.astype(jnp.bfloat16), ((0, 0), (pad, pad), (pad, pad), (0, 0)))
    return _conv_rows(xpad, cp["w"], cp["b"], Ho=H, Wo=W, KH=cp["kh"], KW=cp["kw"],
                      dil=d, row_off=0, col_off=0, slope=negative_slope,
                      out_dtype=out_dtype)


def conv_transpose2d(x, cp, out_dtype=jnp.float32):
    """torch ConvTranspose2d(k=4, s=2, p=1) via polyphase decomposition (review #3):
    four stride-1 2x2-tap convs on the original-resolution input, then interleave."""
    N, H, W, C = x.shape
    cout = cp["cout"]
    xpad = jnp.pad(x.astype(jnp.bfloat16), ((0, 0), (1, 1), (1, 1), (0, 0)))
    ph = []
    for py in range(2):
        for px in range(2):
            ph.append(_conv_rows(xpad, cp["phases"][py * 2 + px], cp["b"],
                                 Ho=H, Wo=W, KH=2, KW=2, dil=1,
                                 row_off=py, col_off=px, slope=None,
                                 out_dtype=out_dtype))
    top = jnp.stack([ph[0], ph[1]], axis=3)       # even output rows, px interleave
    bot = jnp.stack([ph[2], ph[3]], axis=3)       # odd  output rows
    full = jnp.stack([top, bot], axis=2)          # (N, H, 2, W, 2, Cout)
    return full.reshape(N, 2 * H, 2 * W, cout)


# ----------------------------------------------------------------------------------
# Pallas kernel 2: stride-2 conv as a single-K-block matmul (im2col of only 2.25x;
# no K/N padding, no accumulator scratch, fused bias + LeakyReLU).
# ----------------------------------------------------------------------------------
def _mm_kernel(a_ref, w_ref, b_ref, o_ref, *, slope):
    r = jnp.dot(a_ref[...], w_ref[...], preferred_element_type=jnp.float32) + b_ref[...]
    if slope is not None:
        r = jnp.where(r >= 0.0, r, slope * r)
    o_ref[...] = r.astype(o_ref.dtype)


def conv2d_stride2(x, cp, negative_slope=0.1):
    N, H, W, C = x.shape
    KH, KW, cout = cp["kh"], cp["kw"], cp["cout"]
    Ho = (H + 2 - KH) // 2 + 1
    Wo = (W + 2 - KW) // 2 + 1
    xp = jnp.pad(x.astype(jnp.bfloat16), ((0, 0), (1, 1), (1, 1), (0, 0)))
    patches = [xp[:, ky:ky + 2 * (Ho - 1) + 1:2, kx:kx + 2 * (Wo - 1) + 1:2, :]
               for ky in range(KH) for kx in range(KW)]
    K = KH * KW * C
    col = jnp.concatenate(patches, axis=-1).reshape(N * Ho * Wo, K)
    wm = cp["w"].reshape(K, cout)
    M = N * Ho * Wo
    tm = _pick_m_tile(M)

    out = pl.pallas_call(
        partial(_mm_kernel, slope=negative_slope),
        out_shape=jax.ShapeDtypeStruct((M, cout), jnp.bfloat16),
        grid_spec=pltpu.PrefetchScalarGridSpec(
            num_scalar_prefetch=0,
            grid=(M // tm,),
            in_specs=[
                pl.BlockSpec((tm, K), lambda i: (i, 0)),
                pl.BlockSpec((K, cout), lambda i: (0, 0)),
                pl.BlockSpec((1, cout), lambda i: (0, 0)),
            ],
            out_specs=pl.BlockSpec((tm, cout), lambda i: (i, 0)),
        ),
        compiler_params=pltpu.CompilerParams(dimension_semantics=("parallel",)),
    )(col, wm, cp["b"])
    return out.reshape(N, Ho, Wo, cout)


# ----------------------------------------------------------------------------------
# Pallas kernel 3: correlation cost volume, NHWC native (C on lanes), row-banded f2,
# 81 displacements generated in-kernel, LeakyReLU(0.1) and 1/C normalization fused.
# ----------------------------------------------------------------------------------
def _corr_kernel(f1_ref, f2_hbm, o_ref, f2buf, sem, *, md, th, W, C, R, slope):
    n = pl.program_id(0)
    r = pl.program_id(1)
    step = n * R + r
    nsteps = pl.num_programs(0) * R
    band = th + 2 * md
    D = 2 * md + 1
    inv_c = 1.0 / float(C)

    def fetch(s, slot):
        nn = s // R
        rr = s - nn * R
        pltpu.make_async_copy(f2_hbm.at[nn, pl.ds(rr * th, band)],
                              f2buf.at[slot], sem.at[slot]).start()

    @pl.when(step == 0)
    def _():
        fetch(step, 0)

    @pl.when(step + 1 < nsteps)
    def _():
        fetch(step + 1, (step + 1) % 2)

    slot = step % 2
    pltpu.make_async_copy(f2_hbm.at[0, pl.ds(0, band)], f2buf.at[slot], sem.at[slot]).wait()

    for dy in range(D):
        vs = []
        for dx in range(D):
            f2s = f2buf[slot, pl.ds(dy, th), pl.ds(dx, W), :].astype(jnp.float32)
            f1 = f1_ref[...].astype(jnp.float32)
            v = jnp.sum(f1 * f2s, axis=-1) * inv_c          # lane reduce over channels
            v = jnp.where(v >= 0.0, v, slope * v)           # fused LeakyReLU(0.1)
            vs.append(v)
        # pack 9 displacements per store on the lane axis (lane-denser than per-lane writes)
        o_ref[:, :, dy * D:(dy + 1) * D] = jnp.stack(vs, axis=-1).astype(o_ref.dtype)


def correlation(f1, f2, md=4, negative_slope=0.1):
    """f1, f2: (N,H,W,C) -> (N,H,W,(2md+1)^2) NHWC directly; no layout transposes."""
    N, H, W, C = f1.shape
    D = 2 * md + 1
    f1b = f1.astype(jnp.bfloat16)
    f2p = jnp.pad(f2.astype(jnp.bfloat16), ((0, 0), (md, md), (md, md), (0, 0)))
    th = _pick_corr_rows(H, W, C, md)
    R = H // th

    return pl.pallas_call(
        partial(_corr_kernel, md=md, th=th, W=W, C=C, R=R, slope=negative_slope),
        out_shape=jax.ShapeDtypeStruct((N, H, W, D * D), jnp.bfloat16),
        grid_spec=pltpu.PrefetchScalarGridSpec(
            num_scalar_prefetch=0,
            grid=(N, R),
            in_specs=[
                pl.BlockSpec((None, th, W, C), lambda n, r: (n, r, 0, 0)),
                pl.BlockSpec(memory_space=pl.ANY),            # padded f2 stays in HBM
            ],
            out_specs=pl.BlockSpec((None, th, W, D * D), lambda n, r: (n, r, 0, 0)),
            scratch_shapes=[
                pltpu.VMEM((2, th + 2 * md, W + 2 * md, C), jnp.bfloat16),
                pltpu.SemaphoreType.DMA((2,)),
            ],
        ),
        compiler_params=pltpu.CompilerParams(dimension_semantics=("arbitrary", "arbitrary")),
    )(f1b, f2p)


# ----------------------------------------------------------------------------------
# JAX glue: bilinear resize + grid_sample backward warp (data-dependent gathers)
# ----------------------------------------------------------------------------------
# TODO(synk): grid_sample / bilinear resize remain gather-based plain JAX.
def interpolate_bilinear(x, out_h, out_w):
    """torch F.interpolate(mode='bilinear', align_corners=False). x: NHWC."""
    Nb, H, W, C = x.shape
    if (H, W) == (out_h, out_w):
        return x

    def src_idx(out_size, in_size):
        scale = in_size / out_size
        s = (jnp.arange(out_size, dtype=jnp.float32) + 0.5) * scale - 0.5
        s = jnp.maximum(s, 0.0)
        i0 = jnp.minimum(jnp.floor(s), in_size - 1).astype(jnp.int32)
        i1 = jnp.minimum(i0 + 1, in_size - 1)
        frac = s - i0.astype(jnp.float32)
        return i0, i1, frac

    y0, y1, fy = src_idx(out_h, H)
    x0, x1, fx = src_idx(out_w, W)
    r0 = x[:, y0]
    r1 = x[:, y1]
    top = r0[:, :, x0] * (1 - fx)[None, None, :, None] + r0[:, :, x1] * fx[None, None, :, None]
    bot = r1[:, :, x0] * (1 - fx)[None, None, :, None] + r1[:, :, x1] * fx[None, None, :, None]
    return top * (1 - fy)[None, :, None, None] + bot * fy[None, :, None, None]


def backward_warp(inp, flow):
    """PWC-Net Backward(): grid_sample(bilinear, zeros padding) with validity mask."""
    Nb, H, W, C = inp.shape
    flow = flow.astype(jnp.float32)
    gx = jnp.linspace(-1.0, 1.0, W)
    gy = jnp.linspace(-1.0, 1.0, H)
    grid_x = jnp.broadcast_to(gx[None, None, :], (Nb, H, W))
    grid_y = jnp.broadcast_to(gy[None, :, None], (Nb, H, W))
    sx = grid_x + flow[..., 0] / ((W - 1.0) / 2.0)
    sy = grid_y + flow[..., 1] / ((H - 1.0) / 2.0)
    inp1 = jnp.concatenate([inp.astype(jnp.float32),
                            jnp.ones((Nb, H, W, 1), jnp.float32)], axis=-1)
    ix = ((sx + 1.0) * W - 1.0) / 2.0
    iy = ((sy + 1.0) * H - 1.0) / 2.0
    x0f = jnp.floor(ix)
    y0f = jnp.floor(iy)
    x1f = x0f + 1.0
    y1f = y0f + 1.0
    wx1 = ix - x0f
    wx0 = 1.0 - wx1
    wy1 = iy - y0f
    wy0 = 1.0 - wy1
    batch_idx = jnp.arange(Nb)[:, None, None]

    def gather(yf, xf):
        valid = (xf >= 0) & (xf <= W - 1) & (yf >= 0) & (yf <= H - 1)
        xc = jnp.clip(xf, 0, W - 1).astype(jnp.int32)
        yc = jnp.clip(yf, 0, H - 1).astype(jnp.int32)
        vals = inp1[batch_idx, yc, xc]
        return vals * valid[..., None].astype(jnp.float32)

    out = (gather(y0f, x0f) * (wy0 * wx0)[..., None]
           + gather(y0f, x1f) * (wy0 * wx1)[..., None]
           + gather(y1f, x0f) * (wy1 * wx0)[..., None]
           + gather(y1f, x1f) * (wy1 * wx1)[..., None])
    mask = out[..., -1:]
    mask = jnp.where(mask > 0.999, 1.0, 0.0)
    return out[..., :-1] * mask


# ----------------------------------------------------------------------------------
# Parameters (deterministic synthetic init, torch weight layouts; weights are
# reshaped / cast to bf16 kernel form ONCE here, no channel padding stored)
# ----------------------------------------------------------------------------------
class KeyGen:
    def __init__(self, key):
        self.key = key

    def __call__(self):
        self.key, sub = jax.random.split(self.key)
        return sub


def _prep_conv(w, b):
    """torch Conv2d weight (Cout,Cin,KH,KW) -> (KH*KW, Cin, Cout) bf16 tap matrices."""
    cout, cin, kh, kw = w.shape
    wt = jnp.transpose(w, (2, 3, 1, 0)).reshape(kh * kw, cin, cout).astype(jnp.bfloat16)
    return {"w": wt, "b": b.reshape(1, cout).astype(jnp.float32),
            "kh": kh, "kw": kw, "cin": cin, "cout": cout}


def _prep_deconv(w, b):
    """torch ConvTranspose2d weight (Cin,Cout,4,4) -> four (4, Cin, Cout) bf16 polyphase
    tap matrices (phase order: (py,px) = (0,0),(0,1),(1,0),(1,1); taps dy-major)."""
    cin, cout, kh, kw = w.shape
    sel = ((3, 1), (2, 0))   # kernel rows/cols used by output phase 0 / 1, in window order
    phases = []
    for py in range(2):
        for px in range(2):
            taps = [w[:, :, sel[py][dy], sel[px][dx]]
                    for dy in range(2) for dx in range(2)]
            phases.append(jnp.stack(taps, axis=0).astype(jnp.bfloat16))
    return {"phases": phases, "b": b.reshape(1, cout).astype(jnp.float32),
            "cin": cin, "cout": cout}


def _init_conv(key, cout, cin, kh=3, kw=3):
    k1, k2 = jax.random.split(key)
    fan_in = cin * kh * kw
    w = jax.random.normal(k1, (cout, cin, kh, kw), jnp.float32) / math.sqrt(fan_in)
    b = jax.random.normal(k2, (cout,), jnp.float32) * 0.01
    return _prep_conv(w, b)


def _init_deconv(key, cin, cout, kh=4, kw=4):
    k1, k2 = jax.random.split(key)
    fan_in = cin * kh * kw
    w = jax.random.normal(k1, (cin, cout, kh, kw), jnp.float32) / math.sqrt(fan_in)
    b = jax.random.normal(k2, (cout,), jnp.float32) * 0.01
    return _prep_deconv(w, b)


def build_params(key):
    kg = KeyGen(key)
    params = {}
    ext = []
    for cin, cout in [(3, 16), (16, 32), (32, 64), (64, 96), (96, 128), (128, 196)]:
        ext.append([_init_conv(kg(), cout, cin),
                    _init_conv(kg(), cout, cout),
                    _init_conv(kg(), cout, cout)])
    params["extractor"] = ext

    cur_map = {6: 81, 5: 81 + 128 + 2 + 2, 4: 81 + 96 + 2 + 2, 3: 81 + 64 + 2 + 2, 2: 81 + 32 + 2 + 2}
    prev_map = {5: 81, 4: 81 + 128 + 2 + 2, 3: 81 + 96 + 2 + 2, 2: 81 + 64 + 2 + 2}
    for lvl in (6, 5, 4, 3, 2):
        cur = cur_map[lvl]
        d = {}
        if lvl < 6:
            d["upflow"] = _init_deconv(kg(), 2, 2)
            d["upfeat"] = _init_deconv(kg(), prev_map[lvl] + 128 + 128 + 96 + 64 + 32, 2)
        d["one"] = _init_conv(kg(), 128, cur)
        d["two"] = _init_conv(kg(), 128, cur + 128)
        d["thr"] = _init_conv(kg(), 96, cur + 256)
        d["fou"] = _init_conv(kg(), 64, cur + 352)
        d["fiv"] = _init_conv(kg(), 32, cur + 416)
        d["six"] = _init_conv(kg(), 2, cur + 448)
        params[f"dec{lvl}"] = d

    ref_defs = [(565, 128), (128, 128), (128, 128), (128, 96), (96, 64), (64, 32), (32, 2)]
    params["refiner"] = [_init_conv(kg(), co, ci) for ci, co in ref_defs]
    return params


# ----------------------------------------------------------------------------------
# Network forward
# ----------------------------------------------------------------------------------
def extractor_forward(params, x):
    feats = []
    for lvl in range(6):
        p = params[lvl]
        x = conv2d_stride2(x, p[0], negative_slope=0.1)
        x = conv2d_fused(x, p[1], negative_slope=0.1)
        x = conv2d_fused(x, p[2], negative_slope=0.1)
        feats.append(x)
    return feats


def decoder_forward(p, first, second, prev, dbl_backward):
    if prev is None:
        volume = correlation(first, second)                 # LeakyReLU(0.1) fused
        feat = volume
    else:
        flow = conv_transpose2d(prev["flow"], p["upflow"], out_dtype=jnp.float32)
        featup = conv_transpose2d(prev["feat"], p["upfeat"], out_dtype=jnp.float32)
        warped = backward_warp(second, flow * dbl_backward)  # f32 flow / warp math
        volume = correlation(first, warped)                  # LeakyReLU(0.1) fused
        feat = jnp.concatenate([volume, first.astype(jnp.bfloat16),
                                flow.astype(jnp.bfloat16),
                                featup.astype(jnp.bfloat16)], axis=-1)
    for name in ("one", "two", "thr", "fou", "fiv"):
        out = conv2d_fused(feat, p[name], negative_slope=0.1)
        feat = jnp.concatenate([out, feat], axis=-1)
    flow_out = conv2d_fused(feat, p["six"], negative_slope=None, out_dtype=jnp.float32)
    return {"flow": flow_out, "feat": feat}


def refiner_forward(params, x):
    dils = [1, 2, 4, 8, 16, 1, 1]
    for i, (p, d) in enumerate(zip(params, dils)):
        last = i == len(params) - 1
        x = conv2d_fused(x, p, dilation=d,
                         negative_slope=None if last else 0.1,
                         out_dtype=jnp.float32 if last else jnp.bfloat16)
    return x


def pwcnet_forward(params, tensor_first, tensor_second):
    """Inputs in the PyTorch convention: (T, 3, H, W) NCHW, values in [0, 255]."""
    first = tensor_first[:, ::-1, :, :] / 255.0      # BGR flip as in reference
    second = tensor_second[:, ::-1, :, :] / 255.0
    T, C, H, W = first.shape
    Hp = int(math.floor(math.ceil(H / 64.0) * 64.0))
    Wp = int(math.floor(math.ceil(W / 64.0) * 64.0))

    f1 = jnp.transpose(first, (0, 2, 3, 1))          # NHWC
    f2 = jnp.transpose(second, (0, 2, 3, 1))
    f1 = interpolate_bilinear(f1, Hp, Wp)
    f2 = interpolate_bilinear(f2, Hp, Wp)

    feats1 = extractor_forward(params["extractor"], f1)
    feats2 = extractor_forward(params["extractor"], f2)

    est = decoder_forward(params["dec6"], feats1[5], feats2[5], None, None)
    est = decoder_forward(params["dec5"], feats1[4], feats2[4], est, 0.625)
    est = decoder_forward(params["dec4"], feats1[3], feats2[3], est, 1.25)
    est = decoder_forward(params["dec3"], feats1[2], feats2[2], est, 2.5)
    est = decoder_forward(params["dec2"], feats1[1], feats2[1], est, 5.0)

    temp = est["flow"] + refiner_forward(params["refiner"], est["feat"])   # f32
    flow = 20.0 * interpolate_bilinear(temp, H, W)
    scale = jnp.array([float(W) / float(Wp), float(H) / float(Hp)], jnp.float32)
    flow = flow * scale[None, None, None, :]
    return jnp.transpose(flow, (0, 3, 1, 2))         # back to NCHW (T, 2, H, W)


# ----------------------------------------------------------------------------------
if __name__ == "__main__":
    key = jax.random.PRNGKey(0)
    kp, k1, k2 = jax.random.split(key, 3)
    params = build_params(kp)

    T, H, W = 1, 64, 64
    tensor_first = jax.random.uniform(k1, (T, 3, H, W), jnp.float32) * 255.0
    tensor_second = jax.random.uniform(k2, (T, 3, H, W), jnp.float32) * 255.0

    flow = pwcnet_forward(params, tensor_first, tensor_second)
    flow = jax.block_until_ready(flow)

    assert flow.shape == (T, 2, H, W), flow.shape
    assert bool(jnp.all(jnp.isfinite(flow)))
    print("KERNEL_OK")
</pallas_src>

<mosaic_0001>
module attributes {stable_mosaic.version = 11 : i64} {
  func.func @_mm_kernel(%arg0: i32, %arg1: memref<512x27xbf16, #tpu.memory_space<vmem>>, %arg2: memref<27x16xbf16, #tpu.memory_space<vmem>>, %arg3: memref<1x16xf32, #tpu.memory_space<vmem>>, %arg4: memref<512x16xbf16, #tpu.memory_space<vmem>>) attributes {dimension_semantics = [#tpu.dimension_semantics<parallel>], iteration_bounds = array<i64: 2>, scalar_prefetch = 0 : i64, scratch_operands = 0 : i64, tpu.core_type = #tpu.core_type<tc>, window_params = [{transform_indices = @transform_0, window_bounds = array<i64: 512, 27>}, {pipeline_mode = #tpu.pipeline_mode<synchronous>, transform_indices = @transform_1, window_bounds = array<i64: 27, 16>}, {pipeline_mode = #tpu.pipeline_mode<synchronous>, transform_indices = @transform_2, window_bounds = array<i64: 1, 16>}, {transform_indices = @transform_3, window_bounds = array<i64: 512, 16>}]} {
    %c0 = arith.constant 0 : index
    %c0_0 = arith.constant 0 : index
    %0 = vector.load %arg1[%c0, %c0_0] : memref<512x27xbf16, #tpu.memory_space<vmem>>, vector<512x27xbf16>
    %c0_1 = arith.constant 0 : index
    %c0_2 = arith.constant 0 : index
    %1 = vector.load %arg2[%c0_1, %c0_2] : memref<27x16xbf16, #tpu.memory_space<vmem>>, vector<27x16xbf16>
    %cst = arith.constant dense<0.000000e+00> : vector<512x16xf32>
    %2 = tpu.matmul %0, %1, %cst {dimension_numbers = #tpu.dot_dimension_numbers<[1], [0], [0], [1], [0, 0, 1, 1], [], []>} : vector<512x27xbf16>, vector<27x16xbf16>, vector<512x16xf32> -> vector<512x16xf32>
    %c0_3 = arith.constant 0 : index
    %c0_4 = arith.constant 0 : index
    %3 = vector.load %arg3[%c0_3, %c0_4] : memref<1x16xf32, #tpu.memory_space<vmem>>, vector<1x16xf32>
    %4 = vector.broadcast %3 : vector<1x16xf32> to vector<512x16xf32>
    %5 = arith.addf %2, %4 : vector<512x16xf32>
    %cst_5 = arith.constant 0.000000e+00 : f32
    %6 = vector.broadcast %cst_5 : f32 to vector<512x16xf32>
    %7 = arith.cmpf oge, %5, %6 : vector<512x16xf32>
    %cst_6 = arith.constant 1.000000e-01 : f32
    %8 = vector.broadcast %cst_6 : f32 to vector<512x16xf32>
    %9 = arith.mulf %8, %5 : vector<512x16xf32>
    %10 = arith.select %7, %5, %9 : vector<512x16xi1>, vector<512x16xf32>
    %11 = arith.truncf %10 : vector<512x16xf32> to vector<512x16xbf16>
    %c0_7 = arith.constant 0 : index
    %c0_8 = arith.constant 0 : index
    %12 = vector.load %arg4[%c0_7, %c0_8] : memref<512x16xbf16, #tpu.memory_space<vmem>>, vector<512x16xbf16>
    tpu.vector_store %arg4[%c0_7, %c0_8], %11 {strides = array<i32>} : memref<512x16xbf16, #tpu.memory_space<vmem>>, vector<512x16xbf16>,
    return
  }
  func.func @transform_0(%arg0: i32) -> (i32, i32) {
    %c0_i32 = arith.constant 0 : i32
    %c0_i32_0 = arith.constant 0 : i32
    return %arg0, %c0_i32 : i32, i32
  }
  func.func @transform_1(%arg0: i32) -> (i32, i32) {
    %c0_i32 = arith.constant 0 : i32
    %c0_i32_0 = arith.constant 0 : i32
    %c0_i32_1 = arith.constant 0 : i32
    return %c0_i32, %c0_i32_0 : i32, i32
  }
  func.func @transform_2(%arg0: i32) -> (i32, i32) {
    %c0_i32 = arith.constant 0 : i32
    %c0_i32_0 = arith.constant 0 : i32
    %c0_i32_1 = arith.constant 0 : i32
    return %c0_i32, %c0_i32_0 : i32, i32
  }
  func.func @transform_3(%arg0: i32) -> (i32, i32) {
    %c0_i32 = arith.constant 0 : i32
    %c0_i32_0 = arith.constant 0 : i32
    return %arg0, %c0_i32 : i32, i32
  }
}

</mosaic_0001>

<llo_original>
// kernel: tpu_custom_call.1
$region0: #{tpu_custom_call.1}
  #allocation0 [shape = 'u32[]', space=smem, size = 0x4, offset = 0x4, fixed_abs, tag = 'smem constant byte address 0x4 - core index']
  #allocation1 [shape = 'u32[144,128]{1,0:T(1,128)}', space=vmem, size = 0x12000, scoped, tag = 'internal scratch']
  %s0 = inlined_call_operand.vmem [shape: bf16[1024,27], index: 0, kind: input, shape index: {}]
  %s1 = inlined_call_operand.vmem [shape: bf16[27,16], index: 1, kind: input, shape index: {}]
  %s2 = inlined_call_operand.vmem [shape: f32[1,16], index: 2, kind: input, shape index: {}]
  %s3 = inlined_call_operand.vmem [shape: bf16[1024,16], index: 3, kind: output, shape index: {}]
  %s4 = sld [smem:[#allocation0]]
  $region45: #{tpu_custom_call.1} parent=0
    _
  %s6 = ssub.s32 1, %s4
  %s7 = scalar_select 0, %s6, %s4
  loop: start=0, step=1, limit=4
  $region2: #{tpu_custom_call.1} parent=0 // loop_pre_header
    _
  $region3: #{tpu_custom_call.1} parent=0 // loop_header
    %s9 = sphi 0, %s13
    %p10 = scmp.ge.s32.totalorder %s9, 4
    %s19 = sphi 0, %s21
    %s22 = sphi 0, %s19
    %s23 = sphi 0, %s22
    %s39 = sphi 0, %s23
    %s43 = sphi 0, %s43
    %s45 = sphi 0, %s43
    %s46 = sphi 0, %s45
    %s60 = sphi 0, %s46
    %s64 = sphi 0, %s64
    %s66 = sphi 0, %s64
    %s67 = sphi 0, %s66
    %s81 = sphi 0, %s67
    %s87 = sphi 0, %s89
    %s90 = sphi 0, %s87
    %s91 = sphi 0, %s90
    %s107 = sphi 0, %s91
  $region4: #{tpu_custom_call.1} parent=0 // loop_header_branch
    %12 = sbr.rel (%p10) target = $region8
  $region5: #{tpu_custom_call.1} parent=0 // loop_body
    %s14 = ssub.s32 %s9, 1
    %s15 = ssub.s32 %s9, 2
    %s16 = sadd.s32 %s9, 1
    %s17 = ssub.s32 %s9, %s16
    %p18 = scmp.eq.s32.totalorder %s17, 0
    %s20 = sadd.s32 %s19, 1
    %s21 = scalar_select %p18, %s19, %s20
    %p24 = pneg %p18
    %p25 = scmp.eq.s32.totalorder %s9, 1
    %p26 = por %p24, %p25
    %p27 = scmp.ne.s32.totalorder %s19, %s22
    %p28 = scmp.eq.s32.totalorder %s9, 0
    %p29 = por %p27, %p28
    %p30 = scmp.ne.s32.totalorder %s19, %s22
    %p31 = scmp.eq.s32.totalorder %s14, 1
    %p32 = por %p30, %p31
    %p33 = scmp.ne.s32.totalorder %s22, %s23
    %p34 = scmp.eq.s32.totalorder %s14, 0
    %p35 = por %p33, %p34
    %p36 = scmp.ne.s32.totalorder %s22, %s23
    %p37 = scmp.eq.s32.totalorder %s15, 1
    %p38 = por %p36, %p37
    %p40 = scmp.ne.s32.totalorder %s23, %s39
    %p41 = scmp.eq.s32.totalorder %s15, 0
    %p42 = por %p40, %p41
    %s44 = sadd.s32 %s43, 1
    %p47 = scmp.eq.s32.totalorder %s9, 1
    %p48 = scmp.ne.s32.totalorder %s43, %s45
    %p49 = scmp.eq.s32.totalorder %s9, 0
    %p50 = por %p48, %p49
    %p51 = scmp.ne.s32.totalorder %s43, %s45
    %p52 = scmp.eq.s32.totalorder %s14, 1
    %p53 = por %p51, %p52
    %p54 = scmp.ne.s32.totalorder %s45, %s46
    %p55 = scmp.eq.s32.totalorder %s14, 0
    %p56 = por %p54, %p55
    %p57 = scmp.ne.s32.totalorder %s45, %s46
    %p58 = scmp.eq.s32.totalorder %s15, 1
    %p59 = por %p57, %p58
    %p61 = scmp.ne.s32.totalorder %s46, %s60
    %p62 = scmp.eq.s32.totalorder %s15, 0
    %p63 = por %p61, %p62
    %s65 = sadd.s32 %s64, 1
    %p68 = scmp.eq.s32.totalorder %s9, 1
    %p69 = scmp.ne.s32.totalorder %s64, %s66
    %p70 = scmp.eq.s32.totalorder %s9, 0
    %p71 = por %p69, %p70
    %p72 = scmp.ne.s32.totalorder %s64, %s66
    %p73 = scmp.eq.s32.totalorder %s14, 1
    %p74 = por %p72, %p73
    %p75 = scmp.ne.s32.totalorder %s66, %s67
    %p76 = scmp.eq.s32.totalorder %s14, 0
    %p77 = por %p75, %p76
    %p78 = scmp.ne.s32.totalorder %s66, %s67
    %p79 = scmp.eq.s32.totalorder %s15, 1
    %p80 = por %p78, %p79
    %p82 = scmp.ne.s32.totalorder %s67, %s81
    %p83 = scmp.eq.s32.totalorder %s15, 0
    %p84 = por %p82, %p83
    %s85 = ssub.s32 %s9, %s16
    %p86 = scmp.eq.s32.totalorder %s85, 0
    %s88 = sadd.s32 %s87, 1
    %s89 = scalar_select %p86, %s87, %s88
    %p92 = pneg %p86
    %p93 = scmp.eq.s32.totalorder %s9, 1
    %p94 = por %p92, %p93
    %p95 = scmp.ne.s32.totalorder %s87, %s90
    %p96 = scmp.eq.s32.totalorder %s9, 0
    %p97 = por %p95, %p96
    %p98 = scmp.ne.s32.totalorder %s87, %s90
    %p99 = scmp.eq.s32.totalorder %s14, 1
    %p100 = por %p98, %p99
    %p101 = scmp.ne.s32.totalorder %s90, %s91
    %p102 = scmp.eq.s32.totalorder %s14, 0
    %p103 = por %p101, %p102
    %p104 = scmp.ne.s32.totalorder %s90, %s91
    %p105 = scmp.eq.s32.totalorder %s15, 1
    %p106 = por %p104, %p105
    %p108 = scmp.ne.s32.totalorder %s91, %s107
    %p109 = scmp.eq.s32.totalorder %s15, 0
    %p110 = por %p108, %p109
    %p111 = scmp.le.s32.totalorder 1, %s9
    %p112 = scmp.lt.s32.totalorder %s9, 3
    %p113 = pnand %p111, %p112
    %p114 = pneg %p113
    // Predicated region
    $region9: #{tpu_custom_call.1} parent=5 // pred_check
      _
    $region10: #{tpu_custom_call.1} parent=5 // pred_check_branch
      %116 = sbr.rel (%p113) target = $region12
    $region11: #{tpu_custom_call.1} parent=5 // pred_region
      %s117 = ssub.s32 %s9, 1
      // Predicated region
      $region13: #{tpu_custom_call.1} parent=11 // pred_check
        %p118 = pneg %p56
      $region14: #{tpu_custom_call.1} parent=11 // pred_check_branch
        %120 = sbr.rel (%p118) target = $region16
      $region15: #{tpu_custom_call.1} parent=11 // pred_region
        _
      $region16: #{tpu_custom_call.1} parent=11 // pred_fallthru
        _
      // Predicated region
      $region17: #{tpu_custom_call.1} parent=11 // pred_check
        %p121 = pneg %p77
      $region18: #{tpu_custom_call.1} parent=11 // pred_check_branch
        %123 = sbr.rel (%p121) target = $region20
      $region19: #{tpu_custom_call.1} parent=11 // pred_region
        _
      $region20: #{tpu_custom_call.1} parent=11 // pred_fallthru
        _
    $region12: #{tpu_custom_call.1} parent=5 // pred_fallthru
      _
    %p124 = scmp.lt.s32.totalorder %s9, 2
    // Predicated region
    $region21: #{tpu_custom_call.1} parent=5 // pred_check
      %p125 = pneg %p124
    $region22: #{tpu_custom_call.1} parent=5 // pred_check_branch
      %127 = sbr.rel (%p125) target = $region24
    $region23: #{tpu_custom_call.1} parent=5 // pred_region
      // Predicated region
      $region25: #{tpu_custom_call.1} parent=23 // pred_check
        %p128 = pneg %p29
      $region26: #{tpu_custom_call.1} parent=23 // pred_check_branch
        %130 = sbr.rel (%p128) target = $region28
      $region27: #{tpu_custom_call.1} parent=23 // pred_region
        %s131 = smul.u32 64, %s9
        %p132 = scmp.lt.s32.totalorder %s131, 127
        %s133 = scalar_select %p132, %s131, 127
        %s134 = smul.addr %s133, 4
        %s135 = scalar_lea.vmem %s0, %s134
        %s136 = smul.u32 64, %s9
      $region28: #{tpu_custom_call.1} parent=23 // pred_fallthru
        _
    $region24: #{tpu_custom_call.1} parent=5 // pred_fallthru
      _
    %p137 = scmp.le.s32.totalorder 1, %s9
    %p138 = scmp.lt.s32.totalorder %s9, 3
    %p139 = pnand %p137, %p138
    %p140 = pneg %p139
    // Predicated region
    $region29: #{tpu_custom_call.1} parent=5 // pred_check
      _
    $region30: #{tpu_custom_call.1} parent=5 // pred_check_branch
      %142 = sbr.rel (%p139) target = $region32
    $region31: #{tpu_custom_call.1} parent=5 // pred_region
      %s143 = ssub.s32 %s9, 1
      %s144 = smul.u32 64, %s14
      %p145 = scmp.lt.s32.totalorder %s144, 127
      %s146 = scalar_select %p145, %s144, 127
      %s147 = smul.addr %s146, 4
      %s148 = scalar_lea.vmem %s0, %s147
      %p149 = pneg %p35
      %p150 = pneg %p32
      %p151 = pneg %p56
      %p152 = pneg %p53
      %p153 = pneg %p77
      %p154 = pneg %p74
      %p155 = pneg %p103
      %p156 = pneg %p100
      %s157 = smul.u32 64, %s14
      %p158 = scmp.lt.s32.totalorder %s157, 127
      %s159 = scalar_select %p158, %s157, 127
      %s160 = smul.addr %s159, 4
      %s161 = scalar_lea.vmem %s3, %s160
      %s162 = smul.u32 64, %s14
      %p163 = scmp.lt.s32.totalorder %s162, 127
      %s164 = scalar_select %p163, %s162, 127
      %s165 = smul.addr %s164, 4
      %s166 = scalar_lea.vmem %s0, %s165
      %s167 = smul.u32 64, %s14
      %s168 = smul.u32 64, %s14
      %p169 = scmp.lt.s32.totalorder %s168, 127
      %s170 = scalar_select %p169, %s168, 127
      %s171 = smul.addr %s170, 4
      %s172 = scalar_lea.vmem %s3, %s171
      %s173 = smul.u32 64, %s14
      %v175 = vld [vmem:[%s166] sm:$0xf]
      %v176 = vld [vmem:[%s166 + $0x4] sm:$0xf]
      %v177 = vld [vmem:[%s166 + $0x8] sm:$0xf]
      %v178 = vld [vmem:[%s166 + $0xc] sm:$0xf]
      %v179 = vld [vmem:[%s166 + $0x10] sm:$0xf]
      %v180 = vld [vmem:[%s166 + $0x14] sm:$0xf]
      %v181 = vld [vmem:[%s166 + $0x18] sm:$0xf]
      %v182 = vld [vmem:[%s166 + $0x1c] sm:$0xf]
      %v183 = vld [vmem:[%s166 + $0x20] sm:$0xf]
      %v184 = vld [vmem:[%s166 + $0x24] sm:$0xf]
      %v185 = vld [vmem:[%s166 + $0x28] sm:$0xf]
      %v186 = vld [vmem:[%s166 + $0x2c] sm:$0xf]
      %v187 = vld [vmem:[%s166 + $0x30] sm:$0xf]
      %v188 = vld [vmem:[%s166 + $0x34] sm:$0xf]
      %v189 = vld [vmem:[%s166 + $0x38] sm:$0xf]
      %v190 = vld [vmem:[%s166 + $0x3c] sm:$0xf]
      %v191 = vld [vmem:[%s166 + $0x40] sm:$0xf]
      %v192 = vld [vmem:[%s166 + $0x44] sm:$0xf]
      %v193 = vld [vmem:[%s166 + $0x48] sm:$0xf]
      %v194 = vld [vmem:[%s166 + $0x4c] sm:$0xf]
      %v195 = vld [vmem:[%s166 + $0x50] sm:$0xf]
      %v196 = vld [vmem:[%s166 + $0x54] sm:$0xf]
      %v197 = vld [vmem:[%s166 + $0x58] sm:$0xf]
      %v198 = vld [vmem:[%s166 + $0x5c] sm:$0xf]
      %v199 = vld [vmem:[%s166 + $0x60] sm:$0xf]
      %v200 = vld [vmem:[%s166 + $0x64] sm:$0xf]
      %v201 = vld [vmem:[%s166 + $0x68] sm:$0xf]
      %v202 = vld [vmem:[%s166 + $0x6c] sm:$0xf]
      %v203 = vld [vmem:[%s166 + $0x70] sm:$0xf]
      %v204 = vld [vmem:[%s166 + $0x74] sm:$0xf]
      %v205 = vld [vmem:[%s166 + $0x78] sm:$0xf]
      %v206 = vld [vmem:[%s166 + $0x7c] sm:$0xf]
      %v207 = vld [vmem:[%s166 + $0x80] sm:$0xf]
      %v208 = vld [vmem:[%s166 + $0x84] sm:$0xf]
      %v209 = vld [vmem:[%s166 + $0x88] sm:$0xf]
      %v210 = vld [vmem:[%s166 + $0x8c] sm:$0xf]
      %v211 = vld [vmem:[%s166 + $0x90] sm:$0xf]
      %v212 = vld [vmem:[%s166 + $0x94] sm:$0xf]
      %v213 = vld [vmem:[%s166 + $0x98] sm:$0xf]
      %v214 = vld [vmem:[%s166 + $0x9c] sm:$0xf]
      %v215 = vld [vmem:[%s166 + $0xa0] sm:$0xf]
      %v216 = vld [vmem:[%s166 + $0xa4] sm:$0xf]
      %v217 = vld [vmem:[%s166 + $0xa8] sm:$0xf]
      %v218 = vld [vmem:[%s166 + $0xac] sm:$0xf]
      %v219 = vld [vmem:[%s166 + $0xb0] sm:$0xf]
      %v220 = vld [vmem:[%s166 + $0xb4] sm:$0xf]
      %v221 = vld [vmem:[%s166 + $0xb8] sm:$0xf]
      %v222 = vld [vmem:[%s166 + $0xbc] sm:$0xf]
      %v223 = vld [vmem:[%s166 + $0xc0] sm:$0xf]
      %v224 = vld [vmem:[%s166 + $0xc4] sm:$0xf]
      %v225 = vld [vmem:[%s166 + $0xc8] sm:$0xf]
      %v226 = vld [vmem:[%s166 + $0xcc] sm:$0xf]
      %v227 = vld [vmem:[%s166 + $0xd0] sm:$0xf]
      %v228 = vld [vmem:[%s166 + $0xd4] sm:$0xf]
      %v229 = vld [vmem:[%s166 + $0xd8] sm:$0xf]
      %v230 = vld [vmem:[%s166 + $0xdc] sm:$0xf]
      %v231 = vld [vmem:[%s166 + $0xe0] sm:$0xf]
      %v232 = vld [vmem:[%s166 + $0xe4] sm:$0xf]
      %v233 = vld [vmem:[%s166 + $0xe8] sm:$0xf]
      %v234 = vld [vmem:[%s166 + $0xec] sm:$0xf]
      %v235 = vld [vmem:[%s166 + $0xf0] sm:$0xf]
      %v236 = vld [vmem:[%s166 + $0xf4] sm:$0xf]
      %v237 = vld [vmem:[%s166 + $0xf8] sm:$0xf]
      %v238 = vld [vmem:[%s166 + $0xfc] sm:$0xf]
      %v239 = vld [vmem:[%s1] sm:$0xf]
      %v240 = vld [vmem:[%s1 + $0x4] sm:$0xf]
      %v241 = vld [vmem:[%s1 + $0x8] sm:$0xf]
      %v242 = vld [vmem:[%s1 + $0xc] sm:$0x3]
      %v243 = vld [vmem:[%s2] sm:$0x1]
      %v245 = vlaneseq
      %v246 = vshrl.u32 %v245, 7
      %v247 = vsub.s32 0, %v246
      %v248 = vrot.slane %v243, %v247
      %v314 = vunpack.c.l.b16 %v175
      %v315 = vunpack.c.l.b16 %v176
      %v316 = vunpack.c.l.b16 %v177
      %v317 = vunpack.c.l.b16 %v178
      %v318 = vunpack.c.l.b16 %v179
      %v319 = vunpack.c.l.b16 %v180
      %v320 = vunpack.c.l.b16 %v181
      %v321 = vunpack.c.l.b16 %v182
      %v322 = vunpack.c.l.b16 %v183
      %v323 = vunpack.c.l.b16 %v184
      %v324 = vunpack.c.l.b16 %v185
      %v325 = vunpack.c.l.b16 %v186
      %v326 = vunpack.c.l.b16 %v187
      %v327 = vunpack.c.l.b16 %v188
      %v328 = vunpack.c.l.b16 %v189
      %v329 = vunpack.c.l.b16 %v190
      %v330 = vunpack.c.l.b16 %v191
      %v331 = vunpack.c.l.b16 %v192
      %v332 = vunpack.c.l.b16 %v193
      %v333 = vunpack.c.l.b16 %v194
      %v334 = vunpack.c.l.b16 %v195
      %v335 = vunpack.c.l.b16 %v196
      %v336 = vunpack.c.l.b16 %v197
      %v337 = vunpack.c.l.b16 %v198
      %v338 = vunpack.c.l.b16 %v199
      %v339 = vunpack.c.l.b16 %v200
      %v340 = vunpack.c.l.b16 %v201
      %v341 = vunpack.c.l.b16 %v202
      %v342 = vunpack.c.l.b16 %v203
      %v343 = vunpack.c.l.b16 %v204
      %v344 = vunpack.c.l.b16 %v205
      %v345 = vunpack.c.l.b16 %v206
      %v346 = vunpack.c.l.b16 %v207
      %v347 = vunpack.c.l.b16 %v208
      %v348 = vunpack.c.l.b16 %v209
      %v349 = vunpack.c.l.b16 %v210
      %v350 = vunpack.c.l.b16 %v211
      %v351 = vunpack.c.l.b16 %v212
      %v352 = vunpack.c.l.b16 %v213
      %v353 = vunpack.c.l.b16 %v214
      %v354 = vunpack.c.l.b16 %v215
      %v355 = vunpack.c.l.b16 %v216
      %v356 = vunpack.c.l.b16 %v217
      %v357 = vunpack.c.l.b16 %v218
      %v358 = vunpack.c.l.b16 %v219
      %v359 = vunpack.c.l.b16 %v220
      %v360 = vunpack.c.l.b16 %v221
      %v361 = vunpack.c.l.b16 %v222
      %v362 = vunpack.c.l.b16 %v223
      %v363 = vunpack.c.l.b16 %v224
      %v364 = vunpack.c.l.b16 %v225
      %v365 = vunpack.c.l.b16 %v226
      %v366 = vunpack.c.l.b16 %v227
      %v367 = vunpack.c.l.b16 %v228
      %v368 = vunpack.c.l.b16 %v229
      %v369 = vunpack.c.l.b16 %v230
      %v370 = vunpack.c.l.b16 %v231
      %v371 = vunpack.c.l.b16 %v232
      %v372 = vunpack.c.l.b16 %v233
      %v373 = vunpack.c.l.b16 %v234
      %v374 = vunpack.c.l.b16 %v235
      %v375 = vunpack.c.l.b16 %v236
      %v376 = vunpack.c.l.b16 %v237
      %v377 = vunpack.c.l.b16 %v238
      %v378 = vpack.c.b16 %v315, %v314
      %v379 = vpack.c.b16 %v317, %v316
      %v380 = vpack.c.b16 %v319, %v318
      %v381 = vpack.c.b16 %v321, %v320
      %v382 = vpack.c.b16 %v323, %v322
      %v383 = vpack.c.b16 %v325, %v324
      %v384 = vpack.c.b16 %v327, %v326
      %v385 = vpack.c.b16 %v329, %v328
      %v386 = vpack.c.b16 %v331, %v330
      %v387 = vpack.c.b16 %v333, %v332
      %v388 = vpack.c.b16 %v335, %v334
      %v389 = vpack.c.b16 %v337, %v336
      %v390 = vpack.c.b16 %v339, %v338
      %v391 = vpack.c.b16 %v341, %v340
      %v392 = vpack.c.b16 %v343, %v342
      %v393 = vpack.c.b16 %v345, %v344
      %v394 = vpack.c.b16 %v347, %v346
      %v395 = vpack.c.b16 %v349, %v348
      %v396 = vpack.c.b16 %v351, %v350
      %v397 = vpack.c.b16 %v353, %v352
      %v398 = vpack.c.b16 %v355, %v354
      %v399 = vpack.c.b16 %v357, %v356
      %v400 = vpack.c.b16 %v359, %v358
      %v401 = vpack.c.b16 %v361, %v360
      %v402 = vpack.c.b16 %v363, %v362
      %v403 = vpack.c.b16 %v365, %v364
      %v404 = vpack.c.b16 %v367, %v366
      %v405 = vpack.c.b16 %v369, %v368
      %v406 = vpack.c.b16 %v371, %v370
      %v407 = vpack.c.b16 %v373, %v372
      %v408 = vpack.c.b16 %v375, %v374
      %v409 = vpack.c.b16 %v377, %v376
      %v414 = vunpack.c.l.b16 %v239
      %v415 = vunpack.c.l.b16 %v240
      %v416 = vunpack.c.l.b16 %v241
      %v417 = vunpack.c.l.b16 %v242
      %v418 = vpack.c.b16 %v415, %v414
      %v419 = vpack.c.b16 %v417, %v416
      %vm421 = vcmask 220160
      %v423 = vsel %vm421, %v378, 0
      %v426 = vsel %vm421, %v379, 0
      %v429 = vsel %vm421, %v380, 0
      %v432 = vsel %vm421, %v381, 0
      %v435 = vsel %vm421, %v382, 0
      %v438 = vsel %vm421, %v383, 0
      %v441 = vsel %vm421, %v384, 0
      %v444 = vsel %vm421, %v385, 0
      %v447 = vsel %vm421, %v386, 0
      %v450 = vsel %vm421, %v387, 0
      %v453 = vsel %vm421, %v388, 0
      %v456 = vsel %vm421, %v389, 0
      %v459 = vsel %vm421, %v390, 0
      %v462 = vsel %vm421, %v391, 0
      %v465 = vsel %vm421, %v392, 0
      %v468 = vsel %vm421, %v393, 0
      %v471 = vsel %vm421, %v394, 0
      %v474 = vsel %vm421, %v395, 0
      %v477 = vsel %vm421, %v396, 0
      %v480 = vsel %vm421, %v397, 0
      %v483 = vsel %vm421, %v398, 0
      %v486 = vsel %vm421, %v399, 0
      %v489 = vsel %vm421, %v400, 0
      %v492 = vsel %vm421, %v401, 0
      %v495 = vsel %vm421, %v402, 0
      %v498 = vsel %vm421, %v403, 0
      %v501 = vsel %vm421, %v404, 0
      %v504 = vsel %vm421, %v405, 0
      %v507 = vsel %vm421, %v406, 0
      %v510 = vsel %vm421, %v407, 0
      %v513 = vsel %vm421, %v408, 0
      %v516 = vsel %vm421, %v409, 0
      %vm518 = vcmask 1044480
      %vm519 = vcmask 1045504
      %v520 = vsel %vm518, 4294967295, 65535
      %v521 = vsel %vm519, %v520, 0
      %v523 = vand.u32 %v419, %v521
      %525 = vmatprep.subr.bf16.mxu0 0
      %526 = vmatpush1.bf16.msra.mxu0 %v418
      %527 = vmatprep.subr.bf16.mxu0 0
      %528 = vmatpush1.bf16.msra.mxu0 %v523
      %529 = vmatprep.subr.bf16.mxu0 0
      %530 = vmatpush1.bf16.msra.mxu0 0
      %531 = vmatprep.subr.bf16.mxu0 0
      %532 = vmatpush1.bf16.msra.mxu0 0
      %533 = vmatprep.subr.bf16.mxu0 0
      %534 = vmatpush1.bf16.msra.mxu0 0
      %535 = vmatprep.subr.bf16.mxu0 0
      %536 = vmatpush1.bf16.msra.mxu0 0
      %537 = vmatprep.subr.bf16.mxu0 0
      %538 = vmatpush1.bf16.msra.mxu0 0
      %539 = vmatprep.subr.bf16.mxu0 0
      %540 = vmatpush1.bf16.msra.mxu0 0
      %541 = vmatprep.subr.bf16.mxu0 0
      %542 = vmatpush1.bf16.msra.mxu0 0
      %543 = vmatprep.subr.bf16.mxu0 0
      %544 = vmatpush1.bf16.msra.mxu0 0
      %545 = vmatprep.subr.bf16.mxu0 0
      %546 = vmatpush1.bf16.msra.mxu0 0
      %547 = vmatprep.subr.bf16.mxu0 0
      %548 = vmatpush1.bf16.msra.mxu0 0
      %549 = vmatprep.subr.bf16.mxu0 0
      %550 = vmatpush1.bf16.msra.mxu0 0
      %551 = vmatprep.subr.bf16.mxu0 0
      %552 = vmatpush1.bf16.msra.mxu0 0
      %553 = vmatprep.subr.bf16.mxu0 0
      %554 = vmatpush1.bf16.msra.mxu0 0
      %555 = vmatprep.subr.bf16.mxu0 0
      %556 = vmatpush1.bf16.msra.mxu0 0
      %557 = vmatprep.mubr.bf16.mxu0 0
      %558 = vmatmul.mubr.bf16.gmra.mrb[0].mxu0 %v423
      %v559 = vpop.f32.mrb[0].mxu0
      %v560 = vadd.f32 %v248, %v559
      %v561 = vpop.f32.mrb[0].mxu0
      %v562 = vpop.f32.mrb[0].mxu0
      %v563 = vadd.f32 %v248, %v562
      %v564 = vpop.f32.mrb[0].mxu0
      %565 = vmatprep.mubr.bf16.mxu0 0
      %566 = vmatmul.mubr.bf16.gmra.mrb[0].mxu0 %v426
      %v567 = vpop.f32.mrb[0].mxu0
      %v568 = vadd.f32 %v248, %v567
      %v569 = vpop.f32.mrb[0].mxu0
      %v570 = vpop.f32.mrb[0].mxu0
      %v571 = vadd.f32 %v248, %v570
      %v572 = vpop.f32.mrb[0].mxu0
      %573 = vmatprep.mubr.bf16.mxu0 0
      %574 = vmatmul.mubr.bf16.gmra.mrb[0].mxu0 %v429
      %v575 = vpop.f32.mrb[0].mxu0
      %v576 = vadd.f32 %v248, %v575
      %v577 = vpop.f32.mrb[0].mxu0
      %v578 = vpop.f32.mrb[0].mxu0
      %v579 = vadd.f32 %v248, %v578
      %v580 = vpop.f32.mrb[0].mxu0
      %581 = vmatprep.mubr.bf16.mxu0 0
      %582 = vmatmul.mubr.bf16.gmra.mrb[0].mxu0 %v432
      %v583 = vpop.f32.mrb[0].mxu0
      %v584 = vadd.f32 %v248, %v583
      %v585 = vpop.f32.mrb[0].mxu0
      %v586 = vpop.f32.mrb[0].mxu0
      %v587 = vadd.f32 %v248, %v586
      %v588 = vpop.f32.mrb[0].mxu0
      %589 = vmatprep.mubr.bf16.mxu0 0
      %590 = vmatmul.mubr.bf16.gmra.mrb[0].mxu0 %v435
      %v591 = vpop.f32.mrb[0].mxu0
      %v592 = vadd.f32 %v248, %v591
      %v593 = vpop.f32.mrb[0].mxu0
      %v594 = vpop.f32.mrb[0].mxu0
      %v595 = vadd.f32 %v248, %v594
      %v596 = vpop.f32.mrb[0].mxu0
      %597 = vmatprep.mubr.bf16.mxu0 0
      %598 = vmatmul.mubr.bf16.gmra.mrb[0].mxu0 %v438
      %v599 = vpop.f32.mrb[0].mxu0
      %v600 = vadd.f32 %v248, %v599
      %v601 = vpop.f32.mrb[0].mxu0
      %v602 = vpop.f32.mrb[0].mxu0
      %v603 = vadd.f32 %v248, %v602
      %v604 = vpop.f32.mrb[0].mxu0
      %605 = vmatprep.mubr.bf16.mxu0 0
      %606 = vmatmul.mubr.bf16.gmra.mrb[0].mxu0 %v441
      %v607 = vpop.f32.mrb[0].mxu0
      %v608 = vadd.f32 %v248, %v607
      %v609 = vpop.f32.mrb[0].mxu0
      %v610 = vpop.f32.mrb[0].mxu0
      %v611 = vadd.f32 %v248, %v610
      %v612 = vpop.f32.mrb[0].mxu0
      %613 = vmatprep.mubr.bf16.mxu0 0
      %614 = vmatmul.mubr.bf16.gmra.mrb[0].mxu0 %v444
      %v615 = vpop.f32.mrb[0].mxu0
      %v616 = vadd.f32 %v248, %v615
      %v617 = vpop.f32.mrb[0].mxu0
      %v618 = vpop.f32.mrb[0].mxu0
      %v619 = vadd.f32 %v248, %v618
      %v620 = vpop.f32.mrb[0].mxu0
      %621 = vmatprep.mubr.bf16.mxu0 0
      %622 = vmatmul.mubr.bf16.gmra.mrb[0].mxu0 %v447
      %v623 = vpop.f32.mrb[0].mxu0
      %v624 = vadd.f32 %v248, %v623
      %v625 = vpop.f32.mrb[0].mxu0
      %v626 = vpop.f32.mrb[0].mxu0
      %v627 = vadd.f32 %v248, %v626
      %v628 = vpop.f32.mrb[0].mxu0
      %629 = vmatprep.mubr.bf16.mxu0 0
      %630 = vmatmul.mubr.bf16.gmra.mrb[0].mxu0 %v450
      %v631 = vpop.f32.mrb[0].mxu0
      %v632 = vadd.f32 %v248, %v631
      %v633 = vpop.f32.mrb[0].mxu0
      %v634 = vpop.f32.mrb[0].mxu0
      %v635 = vadd.f32 %v248, %v634
      %v636 = vpop.f32.mrb[0].mxu0
      %637 = vmatprep.mubr.bf16.mxu0 0
      %638 = vmatmul.mubr.bf16.gmra.mrb[0].mxu0 %v453
      %v639 = vpop.f32.mrb[0].mxu0
      %v640 = vadd.f32 %v248, %v639
      %v641 = vpop.f32.mrb[0].mxu0
      %v642 = vpop.f32.mrb[0].mxu0
      %v643 = vadd.f32 %v248, %v642
      %v644 = vpop.f32.mrb[0].mxu0
      %645 = vmatprep.mubr.bf16.mxu0 0
      %646 = vmatmul.mubr.bf16.gmra.mrb[0].mxu0 %v456
      %v647 = vpop.f32.mrb[0].mxu0
      %v648 = vadd.f32 %v248, %v647
      %v649 = vpop.f32.mrb[0].mxu0
      %v650 = vpop.f32.mrb[0].mxu0
      %v651 = vadd.f32 %v248, %v650
      %v652 = vpop.f32.mrb[0].mxu0
      %653 = vmatprep.mubr.bf16.mxu0 0
      %654 = vmatmul.mubr.bf16.gmra.mrb[0].mxu0 %v459
      %v655 = vpop.f32.mrb[0].mxu0
      %v656 = vadd.f32 %v248, %v655
      %v657 = vpop.f32.mrb[0].mxu0
      %v658 = vpop.f32.mrb[0].mxu0
      %v659 = vadd.f32 %v248, %v658
      %v660 = vpop.f32.mrb[0].mxu0
      %661 = vmatprep.mubr.bf16.mxu0 0
      %662 = vmatmul.mubr.bf16.gmra.mrb[0].mxu0 %v462
      %v663 = vpop.f32.mrb[0].mxu0
      %v664 = vadd.f32 %v248, %v663
      %v665 = vpop.f32.mrb[0].mxu0
      %v666 = vpop.f32.mrb[0].mxu0
      %v667 = vadd.f32 %v248, %v666
      %v668 = vpop.f32.mrb[0].mxu0
      %669 = vmatprep.mubr.bf16.mxu0 0
      %670 = vmatmul.mubr.bf16.gmra.mrb[0].mxu0 %v465
      %v671 = vpop.f32.mrb[0].mxu0
      %v672 = vadd.f32 %v248, %v671
      %v673 = vpop.f32.mrb[0].mxu0
      %v674 = vpop.f32.mrb[0].mxu0
      %v675 = vadd.f32 %v248, %v674
      %v676 = vpop.f32.mrb[0].mxu0
      %677 = vmatprep.mubr.bf16.mxu0 0
      %678 = vmatmul.mubr.bf16.gmra.mrb[0].mxu0 %v468
      %v679 = vpop.f32.mrb[0].mxu0
      %v680 = vadd.f32 %v248, %v679
      %v681 = vpop.f32.mrb[0].mxu0
      %v682 = vpop.f32.mrb[0].mxu0
      %v683 = vadd.f32 %v248, %v682
      %v684 = vpop.f32.mrb[0].mxu0
      %685 = vmatprep.mubr.bf16.mxu0 0
      %686 = vmatmul.mubr.bf16.gmra.mrb[0].mxu0 %v471
      %v687 = vpop.f32.mrb[0].mxu0
      %v688 = vadd.f32 %v248, %v687
      %v689 = vpop.f32.mrb[0].mxu0
      %v690 = vpop.f32.mrb[0].mxu0
      %v691 = vadd.f32 %v248, %v690
      %v692 = vpop.f32.mrb[0].mxu0
      %693 = vmatprep.mubr.bf16.mxu0 0
      %694 = vmatmul.mubr.bf16.gmra.mrb[0].mxu0 %v474
      %v695 = vpop.f32.mrb[0].mxu0
      %v696 = vadd.f32 %v248, %v695
      %v697 = vpop.f32.mrb[0].mxu0
      %v698 = vpop.f32.mrb[0].mxu0
      %v699 = vadd.f32 %v248, %v698
      %v700 = vpop.f32.mrb[0].mxu0
      %701 = vmatprep.mubr.bf16.mxu0 0
      %702 = vmatmul.mubr.bf16.gmra.mrb[0].mxu0 %v477
      %v703 = vpop.f32.mrb[0].mxu0
      %v704 = vadd.f32 %v248, %v703
      %v705 = vpop.f32.mrb[0].mxu0
      %v706 = vpop.f32.mrb[0].mxu0
      %v707 = vadd.f32 %v248, %v706
      %v708 = vpop.f32.mrb[0].mxu0
      %709 = vmatprep.mubr.bf16.mxu0 0
      %710 = vmatmul.mubr.bf16.gmra.mrb[0].mxu0 %v480
      %v711 = vpop.f32.mrb[0].mxu0
      %v712 = vadd.f32 %v248, %v711
      %v713 = vpop.f32.mrb[0].mxu0
      %v714 = vpop.f32.mrb[0].mxu0
      %v715 = vadd.f32 %v248, %v714
      %v716 = vpop.f32.mrb[0].mxu0
      %717 = vmatprep.mubr.bf16.mxu0 0
      %718 = vmatmul.mubr.bf16.gmra.mrb[0].mxu0 %v483
      %v719 = vpop.f32.mrb[0].mxu0
      %v720 = vadd.f32 %v248, %v719
      %v721 = vpop.f32.mrb[0].mxu0
      %v722 = vpop.f32.mrb[0].mxu0
      %v723 = vadd.f32 %v248, %v722
      %v724 = vpop.f32.mrb[0].mxu0
      %725 = vmatprep.mubr.bf16.mxu0 0
      %726 = vmatmul.mubr.bf16.gmra.mrb[0].mxu0 %v486
      %v727 = vpop.f32.mrb[0].mxu0
      %v728 = vadd.f32 %v248, %v727
      %v729 = vpop.f32.mrb[0].mxu0
      %v730 = vpop.f32.mrb[0].mxu0
      %v731 = vadd.f32 %v248, %v730
      %v732 = vpop.f32.mrb[0].mxu0
      %733 = vmatprep.mubr.bf16.mxu0 0
      %734 = vmatmul.mubr.bf16.gmra.mrb[0].mxu0 %v489
      %v735 = vpop.f32.mrb[0].mxu0
      %v736 = vadd.f32 %v248, %v735
      %v737 = vpop.f32.mrb[0].mxu0
      %v738 = vpop.f32.mrb[0].mxu0
      %v739 = vadd.f32 %v248, %v738
      %v740 = vpop.f32.mrb[0].mxu0
      %741 = vmatprep.mubr.bf16.mxu0 0
      %742 = vmatmul.mubr.bf16.gmra.mrb[0].mxu0 %v492
      %v743 = vpop.f32.mrb[0].mxu0
      %v744 = vadd.f32 %v248, %v743
      %v745 = vpop.f32.mrb[0].mxu0
      %v746 = vpop.f32.mrb[0].mxu0
      %v747 = vadd.f32 %v248, %v746
      %v748 = vpop.f32.mrb[0].mxu0
      %749 = vmatprep.mubr.bf16.mxu0 0
      %750 = vmatmul.mubr.bf16.gmra.mrb[0].mxu0 %v495
      %v751 = vpop.f32.mrb[0].mxu0
      %v752 = vadd.f32 %v248, %v751
      %v753 = vpop.f32.mrb[0].mxu0
      %v754 = vpop.f32.mrb[0].mxu0
      %v755 = vadd.f32 %v248, %v754
      %v756 = vpop.f32.mrb[0].mxu0
      %757 = vmatprep.mubr.bf16.mxu0 0
      %758 = vmatmul.mubr.bf16.gmra.mrb[0].mxu0 %v498
      %v759 = vpop.f32.mrb[0].mxu0
      %v760 = vadd.f32 %v248, %v759
      %v761 = vpop.f32.mrb[0].mxu0
      %v762 = vpop.f32.mrb[0].mxu0
      %v763 = vadd.f32 %v248, %v762
      %v764 = vpop.f32.mrb[0].mxu0
      %765 = vmatprep.mubr.bf16.mxu0 0
      %766 = vmatmul.mubr.bf16.gmra.mrb[0].mxu0 %v501
      %v767 = vpop.f32.mrb[0].mxu0
      %v768 = vadd.f32 %v248, %v767
      %v769 = vpop.f32.mrb[0].mxu0
      %v770 = vpop.f32.mrb[0].mxu0
      %v771 = vadd.f32 %v248, %v770
      %v772 = vpop.f32.mrb[0].mxu0
      %773 = vmatprep.mubr.bf16.mxu0 0
      %774 = vmatmul.mubr.bf16.gmra.mrb[0].mxu0 %v504
      %v775 = vpop.f32.mrb[0].mxu0
      %v776 = vadd.f32 %v248, %v775
      %v777 = vpop.f32.mrb[0].mxu0
      %v778 = vpop.f32.mrb[0].mxu0
      %v779 = vadd.f32 %v248, %v778
      %v780 = vpop.f32.mrb[0].mxu0
      %781 = vmatprep.mubr.bf16.mxu0 0
      %782 = vmatmul.mubr.bf16.gmra.mrb[0].mxu0 %v507
      %v783 = vpop.f32.mrb[0].mxu0
      %v784 = vadd.f32 %v248, %v783
      %v785 = vpop.f32.mrb[0].mxu0
      %v786 = vpop.f32.mrb[0].mxu0
      %v787 = vadd.f32 %v248, %v786
      %v788 = vpop.f32.mrb[0].mxu0
      %789 = vmatprep.mubr.bf16.mxu0 0
      %790 = vmatmul.mubr.bf16.gmra.mrb[0].mxu0 %v510
      %v791 = vpop.f32.mrb[0].mxu0
      %v792 = vadd.f32 %v248, %v791
      %v793 = vpop.f32.mrb[0].mxu0
      %v794 = vpop.f32.mrb[0].mxu0
      %v795 = vadd.f32 %v248, %v794
      %v796 = vpop.f32.mrb[0].mxu0
      %797 = vmatprep.mubr.bf16.mxu0 0
      %798 = vmatmul.mubr.bf16.gmra.mrb[0].mxu0 %v513
      %v799 = vpop.f32.mrb[0].mxu0
      %v800 = vadd.f32 %v248, %v799
      %v801 = vpop.f32.mrb[0].mxu0
      %v802 = vpop.f32.mrb[0].mxu0
      %v803 = vadd.f32 %v248, %v802
      %v804 = vpop.f32.mrb[0].mxu0
      %805 = vmatprep.mubr.bf16.mxu0 0
      %806 = vmatmul.mubr.bf16.gmra.mrb[0].mxu0 %v516
      %v807 = vpop.f32.mrb[0].mxu0
      %v808 = vadd.f32 %v248, %v807
      %v809 = vpop.f32.mrb[0].mxu0
      %v810 = vpop.f32.mrb[0].mxu0
      %v811 = vadd.f32 %v248, %v810
      %v812 = vpop.f32.mrb[0].mxu0
      %813 = vdwg.mxu0
      %vm814 = vcmp.ge.f32.partialorder %v560, 0.0
      %vm815 = vcmp.ge.f32.partialorder %v563, 0.0
      %vm816 = vcmp.ge.f32.partialorder %v568, 0.0
      %vm817 = vcmp.ge.f32.partialorder %v571, 0.0
      %vm818 = vcmp.ge.f32.partialorder %v576, 0.0
      %vm819 = vcmp.ge.f32.partialorder %v579, 0.0
      %vm820 = vcmp.ge.f32.partialorder %v584, 0.0
      %vm821 = vcmp.ge.f32.partialorder %v587, 0.0
      %vm822 = vcmp.ge.f32.partialorder %v592, 0.0
      %vm823 = vcmp.ge.f32.partialorder %v595, 0.0
      %vm824 = vcmp.ge.f32.partialorder %v600, 0.0
      %vm825 = vcmp.ge.f32.partialorder %v603, 0.0
      %vm826 = vcmp.ge.f32.partialorder %v608, 0.0
      %vm827 = vcmp.ge.f32.partialorder %v611, 0.0
      %vm828 = vcmp.ge.f32.partialorder %v616, 0.0
      %vm829 = vcmp.ge.f32.partialorder %v619, 0.0
      %vm830 = vcmp.ge.f32.partialorder %v624, 0.0
      %vm831 = vcmp.ge.f32.partialorder %v627, 0.0
      %vm832 = vcmp.ge.f32.partialorder %v632, 0.0
      %vm833 = vcmp.ge.f32.partialorder %v635, 0.0
      %vm834 = vcmp.ge.f32.partialorder %v640, 0.0
      %vm835 = vcmp.ge.f32.partialorder %v643, 0.0
      %vm836 = vcmp.ge.f32.partialorder %v648, 0.0
      %vm837 = vcmp.ge.f32.partialorder %v651, 0.0
      %vm838 = vcmp.ge.f32.partialorder %v656, 0.0
      %vm839 = vcmp.ge.f32.partialorder %v659, 0.0
      %vm840 = vcmp.ge.f32.partialorder %v664, 0.0
      %vm841 = vcmp.ge.f32.partialorder %v667, 0.0
      %vm842 = vcmp.ge.f32.partialorder %v672, 0.0
      %vm843 = vcmp.ge.f32.partialorder %v675, 0.0
      %vm844 = vcmp.ge.f32.partialorder %v680, 0.0
      %vm845 = vcmp.ge.f32.partialorder %v683, 0.0
      %vm846 = vcmp.ge.f32.partialorder %v688, 0.0
      %vm847 = vcmp.ge.f32.partialorder %v691, 0.0
      %vm848 = vcmp.ge.f32.partialorder %v696, 0.0
      %vm849 = vcmp.ge.f32.partialorder %v699, 0.0
      %vm850 = vcmp.ge.f32.partialorder %v704, 0.0
      %vm851 = vcmp.ge.f32.partialorder %v707, 0.0
      %vm852 = vcmp.ge.f32.partialorder %v712, 0.0
      %vm853 = vcmp.ge.f32.partialorder %v715, 0.0
      %vm854 = vcmp.ge.f32.partialorder %v720, 0.0
      %vm855 = vcmp.ge.f32.partialorder %v723, 0.0
      %vm856 = vcmp.ge.f32.partialorder %v728, 0.0
      %vm857 = vcmp.ge.f32.partialorder %v731, 0.0
      %vm858 = vcmp.ge.f32.partialorder %v736, 0.0
      %vm859 = vcmp.ge.f32.partialorder %v739, 0.0
      %vm860 = vcmp.ge.f32.partialorder %v744, 0.0
      %vm861 = vcmp.ge.f32.partialorder %v747, 0.0
      %vm862 = vcmp.ge.f32.partialorder %v752, 0.0
      %vm863 = vcmp.ge.f32.partialorder %v755, 0.0
      %vm864 = vcmp.ge.f32.partialorder %v760, 0.0
      %vm865 = vcmp.ge.f32.partialorder %v763, 0.0
      %vm866 = vcmp.ge.f32.partialorder %v768, 0.0
      %vm867 = vcmp.ge.f32.partialorder %v771, 0.0
      %vm868 = vcmp.ge.f32.partialorder %v776, 0.0
      %vm869 = vcmp.ge.f32.partialorder %v779, 0.0
      %vm870 = vcmp.ge.f32.partialorder %v784, 0.0
      %vm871 = vcmp.ge.f32.partialorder %v787, 0.0
      %vm872 = vcmp.ge.f32.partialorder %v792, 0.0
      %vm873 = vcmp.ge.f32.partialorder %v795, 0.0
      %vm874 = vcmp.ge.f32.partialorder %v800, 0.0
      %vm875 = vcmp.ge.f32.partialorder %v803, 0.0
      %vm876 = vcmp.ge.f32.partialorder %v808, 0.0
      %vm877 = vcmp.ge.f32.partialorder %v811, 0.0
      %v878 = vmul.f32 %v560, 0.1
      %v879 = vmul.f32 %v563, 0.1
      %v880 = vmul.f32 %v568, 0.1
      %v881 = vmul.f32 %v571, 0.1
      %v882 = vmul.f32 %v576, 0.1
      %v883 = vmul.f32 %v579, 0.1
      %v884 = vmul.f32 %v584, 0.1
      %v885 = vmul.f32 %v587, 0.1
      %v886 = vmul.f32 %v592, 0.1
      %v887 = vmul.f32 %v595, 0.1
      %v888 = vmul.f32 %v600, 0.1
      %v889 = vmul.f32 %v603, 0.1
      %v890 = vmul.f32 %v608, 0.1
      %v891 = vmul.f32 %v611, 0.1
      %v892 = vmul.f32 %v616, 0.1
      %v893 = vmul.f32 %v619, 0.1
      %v894 = vmul.f32 %v624, 0.1
      %v895 = vmul.f32 %v627, 0.1
      %v896 = vmul.f32 %v632, 0.1
      %v897 = vmul.f32 %v635, 0.1
      %v898 = vmul.f32 %v640, 0.1
      %v899 = vmul.f32 %v643, 0.1
      %v900 = vmul.f32 %v648, 0.1
      %v901 = vmul.f32 %v651, 0.1
      %v902 = vmul.f32 %v656, 0.1
      %v903 = vmul.f32 %v659, 0.1
      %v904 = vmul.f32 %v664, 0.1
      %v905 = vmul.f32 %v667, 0.1
      %v906 = vmul.f32 %v672, 0.1
      %v907 = vmul.f32 %v675, 0.1
      %v908 = vmul.f32 %v680, 0.1
      %v909 = vmul.f32 %v683, 0.1
      %v910 = vmul.f32 %v688, 0.1
      %v911 = vmul.f32 %v691, 0.1
      %v912 = vmul.f32 %v696, 0.1
      %v913 = vmul.f32 %v699, 0.1
      %v914 = vmul.f32 %v704, 0.1
      %v915 = vmul.f32 %v707, 0.1
      %v916 = vmul.f32 %v712, 0.1
      %v917 = vmul.f32 %v715, 0.1
      %v918 = vmul.f32 %v720, 0.1
      %v919 = vmul.f32 %v723, 0.1
      %v920 = vmul.f32 %v728, 0.1
      %v921 = vmul.f32 %v731, 0.1
      %v922 = vmul.f32 %v736, 0.1
      %v923 = vmul.f32 %v739, 0.1
      %v924 = vmul.f32 %v744, 0.1
      %v925 = vmul.f32 %v747, 0.1
      %v926 = vmul.f32 %v752, 0.1
      %v927 = vmul.f32 %v755, 0.1
      %v928 = vmul.f32 %v760, 0.1
      %v929 = vmul.f32 %v763, 0.1
      %v930 = vmul.f32 %v768, 0.1
      %v931 = vmul.f32 %v771, 0.1
      %v932 = vmul.f32 %v776, 0.1
      %v933 = vmul.f32 %v779, 0.1
      %v934 = vmul.f32 %v784, 0.1
      %v935 = vmul.f32 %v787, 0.1
      %v936 = vmul.f32 %v792, 0.1
      %v937 = vmul.f32 %v795, 0.1
      %v938 = vmul.f32 %v800, 0.1
      %v939 = vmul.f32 %v803, 0.1
      %v940 = vmul.f32 %v808, 0.1
      %v941 = vmul.f32 %v811, 0.1
      %v942 = vsel %vm814, %v560, %v878
      %v943 = vsel %vm815, %v563, %v879
      %v944 = vsel %vm816, %v568, %v880
      %v945 = vsel %vm817, %v571, %v881
      %v946 = vsel %vm818, %v576, %v882
      %v947 = vsel %vm819, %v579, %v883
      %v948 = vsel %vm820, %v584, %v884
      %v949 = vsel %vm821, %v587, %v885
      %v950 = vsel %vm822, %v592, %v886
      %v951 = vsel %vm823, %v595, %v887
      %v952 = vsel %vm824, %v600, %v888
      %v953 = vsel %vm825, %v603, %v889
      %v954 = vsel %vm826, %v608, %v890
      %v955 = vsel %vm827, %v611, %v891
      %v956 = vsel %vm828, %v616, %v892
      %v957 = vsel %vm829, %v619, %v893
      %v958 = vsel %vm830, %v624, %v894
      %v959 = vsel %vm831, %v627, %v895
      %v960 = vsel %vm832, %v632, %v896
      %v961 = vsel %vm833, %v635, %v897
      %v962 = vsel %vm834, %v640, %v898
      %v963 = vsel %vm835, %v643, %v899
      %v964 = vsel %vm836, %v648, %v900
      %v965 = vsel %vm837, %v651, %v901
      %v966 = vsel %vm838, %v656, %v902
      %v967 = vsel %vm839, %v659, %v903
      %v968 = vsel %vm840, %v664, %v904
      %v969 = vsel %vm841, %v667, %v905
      %v970 = vsel %vm842, %v672, %v906
      %v971 = vsel %vm843, %v675, %v907
      %v972 = vsel %vm844, %v680, %v908
      %v973 = vsel %vm845, %v683, %v909
      %v974 = vsel %vm846, %v688, %v910
      %v975 = vsel %vm847, %v691, %v911
      %v976 = vsel %vm848, %v696, %v912
      %v977 = vsel %vm849, %v699, %v913
      %v978 = vsel %vm850, %v704, %v914
      %v979 = vsel %vm851, %v707, %v915
      %v980 = vsel %vm852, %v712, %v916
      %v981 = vsel %vm853, %v715, %v917
      %v982 = vsel %vm854, %v720, %v918
      %v983 = vsel %vm855, %v723, %v919
      %v984 = vsel %vm856, %v728, %v920
      %v985 = vsel %vm857, %v731, %v921
      %v986 = vsel %vm858, %v736, %v922
      %v987 = vsel %vm859, %v739, %v923
      %v988 = vsel %vm860, %v744, %v924
      %v989 = vsel %vm861, %v747, %v925
      %v990 = vsel %vm862, %v752, %v926
      %v991 = vsel %vm863, %v755, %v927
      %v992 = vsel %vm864, %v760, %v928
      %v993 = vsel %vm865, %v763, %v929
      %v994 = vsel %vm866, %v768, %v930
      %v995 = vsel %vm867, %v771, %v931
      %v996 = vsel %vm868, %v776, %v932
      %v997 = vsel %vm869, %v779, %v933
      %v998 = vsel %vm870, %v784, %v934
      %v999 = vsel %vm871, %v787, %v935
      %v1000 = vsel %vm872, %v792, %v936
      %v1001 = vsel %vm873, %v795, %v937
      %v1002 = vsel %vm874, %v800, %v938
      %v1003 = vsel %vm875, %v803, %v939
      %v1004 = vsel %vm876, %v808, %v940
      %v1005 = vsel %vm877, %v811, %v941
      %v1006 = vpack.c.bf16 %v943, %v942
      %v1007 = vpack.c.bf16 %v945, %v944
      %v1008 = vpack.c.bf16 %v947, %v946
      %v1009 = vpack.c.bf16 %v949, %v948
      %v1010 = vpack.c.bf16 %v951, %v950
      %v1011 = vpack.c.bf16 %v953, %v952
      %v1012 = vpack.c.bf16 %v955, %v954
      %v1013 = vpack.c.bf16 %v957, %v956
      %v1014 = vpack.c.bf16 %v959, %v958
      %v1015 = vpack.c.bf16 %v961, %v960
      %v1016 = vpack.c.bf16 %v963, %v962
      %v1017 = vpack.c.bf16 %v965, %v964
      %v1018 = vpack.c.bf16 %v967, %v966
      %v1019 = vpack.c.bf16 %v969, %v968
      %v1020 = vpack.c.bf16 %v971, %v970
      %v1021 = vpack.c.bf16 %v973, %v972
      %v1022 = vpack.c.bf16 %v975, %v974
      %v1023 = vpack.c.bf16 %v977, %v976
      %v1024 = vpack.c.bf16 %v979, %v978
      %v1025 = vpack.c.bf16 %v981, %v980
      %v1026 = vpack.c.bf16 %v983, %v982
      %v1027 = vpack.c.bf16 %v985, %v984
      %v1028 = vpack.c.bf16 %v987, %v986
      %v1029 = vpack.c.bf16 %v989, %v988
      %v1030 = vpack.c.bf16 %v991, %v990
      %v1031 = vpack.c.bf16 %v993, %v992
      %v1032 = vpack.c.bf16 %v995, %v994
      %v1033 = vpack.c.bf16 %v997, %v996
      %v1034 = vpack.c.bf16 %v999, %v998
      %v1035 = vpack.c.bf16 %v1001, %v1000
      %v1036 = vpack.c.bf16 %v1003, %v1002
      %v1037 = vpack.c.bf16 %v1005, %v1004
      %v1070 = vunpack.c.l.b16 %v1006
      %v1071 = vunpack.c.h.b16 %v1006
      %v1072 = vunpack.c.l.b16 %v1007
      %v1073 = vunpack.c.h.b16 %v1007
      %v1074 = vunpack.c.l.b16 %v1008
      %v1075 = vunpack.c.h.b16 %v1008
      %v1076 = vunpack.c.l.b16 %v1009
      %v1077 = vunpack.c.h.b16 %v1009
      %v1078 = vunpack.c.l.b16 %v1010
      %v1079 = vunpack.c.h.b16 %v1010
      %v1080 = vunpack.c.l.b16 %v1011
      %v1081 = vunpack.c.h.b16 %v1011
      %v1082 = vunpack.c.l.b16 %v1012
      %v1083 = vunpack.c.h.b16 %v1012
      %v1084 = vunpack.c.l.b16 %v1013
      %v1085 = vunpack.c.h.b16 %v1013
      %v1086 = vunpack.c.l.b16 %v1014
      %v1087 = vunpack.c.h.b16 %v1014
      %v1088 = vunpack.c.l.b16 %v1015
      %v1089 = vunpack.c.h.b16 %v1015
      %v1090 = vunpack.c.l.b16 %v1016
      %v1091 = vunpack.c.h.b16 %v1016
      %v1092 = vunpack.c.l.b16 %v1017
      %v1093 = vunpack.c.h.b16 %v1017
      %v1094 = vunpack.c.l.b16 %v1018
      %v1095 = vunpack.c.h.b16 %v1018
      %v1096 = vunpack.c.l.b16 %v1019
      %v1097 = vunpack.c.h.b16 %v1019
      %v1098 = vunpack.c.l.b16 %v1020
      %v1099 = vunpack.c.h.b16 %v1020
      %v1100 = vunpack.c.l.b16 %v1021
      %v1101 = vunpack.c.h.b16 %v1021
      %v1102 = vunpack.c.l.b16 %v1022
      %v1103 = vunpack.c.h.b16 %v1022
      %v1104 = vunpack.c.l.b16 %v1023
      %v1105 = vunpack.c.h.b16 %v1023
      %v1106 = vunpack.c.l.b16 %v1024
      %v1107 = vunpack.c.h.b16 %v1024
      %v1108 = vunpack.c.l.b16 %v1025
      %v1109 = vunpack.c.h.b16 %v1025
      %v1110 = vunpack.c.l.b16 %v1026
      %v1111 = vunpack.c.h.b16 %v1026
      %v1112 = vunpack.c.l.b16 %v1027
      %v1113 = vunpack.c.h.b16 %v1027
      %v1114 = vunpack.c.l.b16 %v1028
      %v1115 = vunpack.c.h.b16 %v1028
      %v1116 = vunpack.c.l.b16 %v1029
      %v1117 = vunpack.c.h.b16 %v1029
      %v1118 = vunpack.c.l.b16 %v1030
      %v1119 = vunpack.c.h.b16 %v1030
      %v1120 = vunpack.c.l.b16 %v1031
      %v1121 = vunpack.c.h.b16 %v1031
      %v1122 = vunpack.c.l.b16 %v1032
      %v1123 = vunpack.c.h.b16 %v1032
      %v1124 = vunpack.c.l.b16 %v1033
      %v1125 = vunpack.c.h.b16 %v1033
      %v1126 = vunpack.c.l.b16 %v1034
      %v1127 = vunpack.c.h.b16 %v1034
      %v1128 = vunpack.c.l.b16 %v1035
      %v1129 = vunpack.c.h.b16 %v1035
      %v1130 = vunpack.c.l.b16 %v1036
      %v1131 = vunpack.c.h.b16 %v1036
      %v1132 = vunpack.c.l.b16 %v1037
      %v1133 = vunpack.c.h.b16 %v1037
      %v1134 = vpack.c.b16 %v1070, %v1070
      %v1135 = vpack.c.b16 %v1071, %v1071
      %v1136 = vpack.c.b16 %v1072, %v1072
      %v1137 = vpack.c.b16 %v1073, %v1073
      %v1138 = vpack.c.b16 %v1074, %v1074
      %v1139 = vpack.c.b16 %v1075, %v1075
      %v1140 = vpack.c.b16 %v1076, %v1076
      %v1141 = vpack.c.b16 %v1077, %v1077
      %v1142 = vpack.c.b16 %v1078, %v1078
      %v1143 = vpack.c.b16 %v1079, %v1079
      %v1144 = vpack.c.b16 %v1080, %v1080
      %v1145 = vpack.c.b16 %v1081, %v1081
      %v1146 = vpack.c.b16 %v1082, %v1082
      %v1147 = vpack.c.b16 %v1083, %v1083
      %v1148 = vpack.c.b16 %v1084, %v1084
      %v1149 = vpack.c.b16 %v1085, %v1085
      %v1150 = vpack.c.b16 %v1086, %v1086
      %v1151 = vpack.c.b16 %v1087, %v1087
      %v1152 = vpack.c.b16 %v1088, %v1088
      %v1153 = vpack.c.b16 %v1089, %v1089
      %v1154 = vpack.c.b16 %v1090, %v1090
      %v1155 = vpack.c.b16 %v1091, %v1091
      %v1156 = vpack.c.b16 %v1092, %v1092
      %v1157 = vpack.c.b16 %v1093, %v1093
      %v1158 = vpack.c.b16 %v1094, %v1094
      %v1159 = vpack.c.b16 %v1095, %v1095
      %v1160 = vpack.c.b16 %v1096, %v1096
      %v1161 = vpack.c.b16 %v1097, %v1097
      %v1162 = vpack.c.b16 %v1098, %v1098
      %v1163 = vpack.c.b16 %v1099, %v1099
      %v1164 = vpack.c.b16 %v1100, %v1100
      %v1165 = vpack.c.b16 %v1101, %v1101
      %v1166 = vpack.c.b16 %v1102, %v1102
      %v1167 = vpack.c.b16 %v1103, %v1103
      %v1168 = vpack.c.b16 %v1104, %v1104
      %v1169 = vpack.c.b16 %v1105, %v1105
      %v1170 = vpack.c.b16 %v1106, %v1106
      %v1171 = vpack.c.b16 %v1107, %v1107
      %v1172 = vpack.c.b16 %v1108, %v1108
      %v1173 = vpack.c.b16 %v1109, %v1109
      %v1174 = vpack.c.b16 %v1110, %v1110
      %v1175 = vpack.c.b16 %v1111, %v1111
      %v1176 = vpack.c.b16 %v1112, %v1112
      %v1177 = vpack.c.b16 %v1113, %v1113
      %v1178 = vpack.c.b16 %v1114, %v1114
      %v1179 = vpack.c.b16 %v1115, %v1115
      %v1180 = vpack.c.b16 %v1116, %v1116
      %v1181 = vpack.c.b16 %v1117, %v1117
      %v1182 = vpack.c.b16 %v1118, %v1118
      %v1183 = vpack.c.b16 %v1119, %v1119
      %v1184 = vpack.c.b16 %v1120, %v1120
      %v1185 = vpack.c.b16 %v1121, %v1121
      %v1186 = vpack.c.b16 %v1122, %v1122
      %v1187 = vpack.c.b16 %v1123, %v1123
      %v1188 = vpack.c.b16 %v1124, %v1124
      %v1189 = vpack.c.b16 %v1125, %v1125
      %v1190 = vpack.c.b16 %v1126, %v1126
      %v1191 = vpack.c.b16 %v1127, %v1127
      %v1192 = vpack.c.b16 %v1128, %v1128
      %v1193 = vpack.c.b16 %v1129, %v1129
      %v1194 = vpack.c.b16 %v1130, %v1130
      %v1195 = vpack.c.b16 %v1131, %v1131
      %v1196 = vpack.c.b16 %v1132, %v1132
      %v1197 = vpack.c.b16 %v1133, %v1133
      %vm1262 = vcmask 125952
      %1263 = vst.msk [vmem:[%s172] sm:$0xf] %vm1262, %v1134
      %1264 = vst.msk [vmem:[%s172 + $0x4] sm:$0xf] %vm1262, %v1135
      %1265 = vst.msk [vmem:[%s172 + $0x8] sm:$0xf] %vm1262, %v1136
      %1266 = vst.msk [vmem:[%s172 + $0xc] sm:$0xf] %vm1262, %v1137
      %1267 = vst.msk [vmem:[%s172 + $0x10] sm:$0xf] %vm1262, %v1138
      %1268 = vst.msk [vmem:[%s172 + $0x14] sm:$0xf] %vm1262, %v1139
      %1269 = vst.msk [vmem:[%s172 + $0x18] sm:$0xf] %vm1262, %v1140
      %1270 = vst.msk [vmem:[%s172 + $0x1c] sm:$0xf] %vm1262, %v1141
      %1271 = vst.msk [vmem:[%s172 + $0x20] sm:$0xf] %vm1262, %v1142
      %1272 = vst.msk [vmem:[%s172 + $0x24] sm:$0xf] %vm1262, %v1143
      %1273 = vst.msk [vmem:[%s172 + $0x28] sm:$0xf] %vm1262, %v1144
      %1274 = vst.msk [vmem:[%s172 + $0x2c] sm:$0xf] %vm1262, %v1145
      %1275 = vst.msk [vmem:[%s172 + $0x30] sm:$0xf] %vm1262, %v1146
      %1276 = vst.msk [vmem:[%s172 + $0x34] sm:$0xf] %vm1262, %v1147
      %1277 = vst.msk [vmem:[%s172 + $0x38] sm:$0xf] %vm1262, %v1148
      %1278 = vst.msk [vmem:[%s172 + $0x3c] sm:$0xf] %vm1262, %v1149
      %1279 = vst.msk [vmem:[%s172 + $0x40] sm:$0xf] %vm1262, %v1150
      %1280 = vst.msk [vmem:[%s172 + $0x44] sm:$0xf] %vm1262, %v1151
      %1281 = vst.msk [vmem:[%s172 + $0x48] sm:$0xf] %vm1262, %v1152
      %1282 = vst.msk [vmem:[%s172 + $0x4c] sm:$0xf] %vm1262, %v1153
      %1283 = vst.msk [vmem:[%s172 + $0x50] sm:$0xf] %vm1262, %v1154
      %1284 = vst.msk [vmem:[%s172 + $0x54] sm:$0xf] %vm1262, %v1155
      %1285 = vst.msk [vmem:[%s172 + $0x58] sm:$0xf] %vm1262, %v1156
      %1286 = vst.msk [vmem:[%s172 + $0x5c] sm:$0xf] %vm1262, %v1157
      %1287 = vst.msk [vmem:[%s172 + $0x60] sm:$0xf] %vm1262, %v1158
      %1288 = vst.msk [vmem:[%s172 + $0x64] sm:$0xf] %vm1262, %v1159
      %1289 = vst.msk [vmem:[%s172 + $0x68] sm:$0xf] %vm1262, %v1160
      %1290 = vst.msk [vmem:[%s172 + $0x6c] sm:$0xf] %vm1262, %v1161
      %1291 = vst.msk [vmem:[%s172 + $0x70] sm:$0xf] %vm1262, %v1162
      %1292 = vst.msk [vmem:[%s172 + $0x74] sm:$0xf] %vm1262, %v1163
      %1293 = vst.msk [vmem:[%s172 + $0x78] sm:$0xf] %vm1262, %v1164
      %1294 = vst.msk [vmem:[%s172 + $0x7c] sm:$0xf] %vm1262, %v1165
      %1295 = vst.msk [vmem:[%s172 + $0x80] sm:$0xf] %vm1262, %v1166
      %1296 = vst.msk [vmem:[%s172 + $0x84] sm:$0xf] %vm1262, %v1167
      %1297 = vst.msk [vmem:[%s172 + $0x88] sm:$0xf] %vm1262, %v1168
      %1298 = vst.msk [vmem:[%s172 + $0x8c] sm:$0xf] %vm1262, %v1169
      %1299 = vst.msk [vmem:[%s172 + $0x90] sm:$0xf] %vm1262, %v1170
      %1300 = vst.msk [vmem:[%s172 + $0x94] sm:$0xf] %vm1262, %v1171
      %1301 = vst.msk [vmem:[%s172 + $0x98] sm:$0xf] %vm1262, %v1172
      %1302 = vst.msk [vmem:[%s172 + $0x9c] sm:$0xf] %vm1262, %v1173
      %1303 = vst.msk [vmem:[%s172 + $0xa0] sm:$0xf] %vm1262, %v1174
      %1304 = vst.msk [vmem:[%s172 + $0xa4] sm:$0xf] %vm1262, %v1175
      %1305 = vst.msk [vmem:[%s172 + $0xa8] sm:$0xf] %vm1262, %v1176
      %1306 = vst.msk [vmem:[%s172 + $0xac] sm:$0xf] %vm1262, %v1177
      %1307 = vst.msk [vmem:[%s172 + $0xb0] sm:$0xf] %vm1262, %v1178
      %1308 = vst.msk [vmem:[%s172 + $0xb4] sm:$0xf] %vm1262, %v1179
      %1309 = vst.msk [vmem:[%s172 + $0xb8] sm:$0xf] %vm1262, %v1180
      %1310 = vst.msk [vmem:[%s172 + $0xbc] sm:$0xf] %vm1262, %v1181
      %1311 = vst.msk [vmem:[%s172 + $0xc0] sm:$0xf] %vm1262, %v1182
      %1312 = vst.msk [vmem:[%s172 + $0xc4] sm:$0xf] %vm1262, %v1183
      %1313 = vst.msk [vmem:[%s172 + $0xc8] sm:$0xf] %vm1262, %v1184
      %1314 = vst.msk [vmem:[%s172 + $0xcc] sm:$0xf] %vm1262, %v1185
      %1315 = vst.msk [vmem:[%s172 + $0xd0] sm:$0xf] %vm1262, %v1186
      %1316 = vst.msk [vmem:[%s172 + $0xd4] sm:$0xf] %vm1262, %v1187
      %1317 = vst.msk [vmem:[%s172 + $0xd8] sm:$0xf] %vm1262, %v1188
      %1318 = vst.msk [vmem:[%s172 + $0xdc] sm:$0xf] %vm1262, %v1189
      %1319 = vst.msk [vmem:[%s172 + $0xe0] sm:$0xf] %vm1262, %v1190
      %1320 = vst.msk [vmem:[%s172 + $0xe4] sm:$0xf] %vm1262, %v1191
      %1321 = vst.msk [vmem:[%s172 + $0xe8] sm:$0xf] %vm1262, %v1192
      %1322 = vst.msk [vmem:[%s172 + $0xec] sm:$0xf] %vm1262, %v1193
      %1323 = vst.msk [vmem:[%s172 + $0xf0] sm:$0xf] %vm1262, %v1194
      %1324 = vst.msk [vmem:[%s172 + $0xf4] sm:$0xf] %vm1262, %v1195
      %1325 = vst.msk [vmem:[%s172 + $0xf8] sm:$0xf] %vm1262, %v1196
      %1326 = vst.msk [vmem:[%s172 + $0xfc] sm:$0xf] %vm1262, %v1197
      %s1327 = smul.u32 64, %s14
      %p1328 = scmp.lt.s32.totalorder %s1327, 127
      %s1329 = scalar_select %p1328, %s1327, 127
      %s1330 = smul.addr %s1329, 4
      %s1331 = scalar_lea.vmem %s3, %s1330
      // Predicated region
      $region33: #{tpu_custom_call.1} parent=31 // pred_check
        %p1332 = pneg %p100
      $region34: #{tpu_custom_call.1} parent=31 // pred_check_branch
        %1334 = sbr.rel (%p1332) target = $region36
      $region35: #{tpu_custom_call.1} parent=31 // pred_region
        %s1335 = smul.u32 64, %s14
      $region36: #{tpu_custom_call.1} parent=31 // pred_fallthru
        _
    $region32: #{tpu_custom_call.1} parent=5 // pred_fallthru
      _
    %p1336 = scmp.le.s32.totalorder 2, %s9
    // Predicated region
    $region37: #{tpu_custom_call.1} parent=5 // pred_check
      %p1337 = pneg %p1336
    $region38: #{tpu_custom_call.1} parent=5 // pred_check_branch
      %1339 = sbr.rel (%p1337) target = $region40
    $region39: #{tpu_custom_call.1} parent=5 // pred_region
      %s1340 = ssub.s32 %s9, 2
      // Predicated region
      $region41: #{tpu_custom_call.1} parent=39 // pred_check
        %p1341 = pneg %p106
      $region42: #{tpu_custom_call.1} parent=39 // pred_check_branch
        %1343 = sbr.rel (%p1341) target = $region44
      $region43: #{tpu_custom_call.1} parent=39 // pred_region
        %s1344 = smul.u32 64, %s15
        %p1345 = scmp.lt.s32.totalorder %s1344, 127
        %s1346 = scalar_select %p1345, %s1344, 127
        %s1347 = smul.addr %s1346, 4
        %s1348 = scalar_lea.vmem %s3, %s1347
      $region44: #{tpu_custom_call.1} parent=39 // pred_fallthru
        _
    $region40: #{tpu_custom_call.1} parent=5 // pred_fallthru
      _
  $region6: #{tpu_custom_call.1} parent=0 // loop_footer
    %s13 = sadd.s32 1, %s9
  $region7: #{tpu_custom_call.1} parent=0 // loop_footer_branch
    %8 = sbr.rel target = $region3
  $region8: #{tpu_custom_call.1} parent=0 // loop_exit
    _

</llo_original>
